<compile_context>
chip_gen: v7x
topology: tpu7x:2x2x1
jax: 0.10.0
libtpu: 0.0.40
codegen_flags: <defaults>
</compile_context>

<pallas_src>
import functools
import math

import jax
import jax.numpy as jnp
from jax.experimental import pallas as pl
from jax.experimental.pallas import tpu as pltpu


_SMALL_BYPASS_BYTES = 256 * 1024     # below this, XLA's fused transpose wins
_MIN_PIPELINE_BYTES = 1024 * 1024    # above this, force >= 2 grid steps


@functools.lru_cache(maxsize=None)
def _budgets():
    """(vmem_limit_bytes, block_budget_bytes) for the current TPU generation."""
    vmem_phys = None
    try:
        vmem_phys = int(getattr(pltpu.get_tpu_info(), "vmem_capacity_bytes", 0)) or None
    except Exception:
        vmem_phys = None
    if vmem_phys is None:
        vmem_phys = 64 * 1024 * 1024                     # conservative default
    if vmem_phys >= 128 * 1024 * 1024:                   # v5e / v6e: 128 MiB VMEM
        return 64 * 1024 * 1024, 8 * 1024 * 1024
    # v7x-class: 64 MiB per TensorCore -> keep headroom for compiler scratch.
    return min(48 * 1024 * 1024, vmem_phys * 3 // 4), 4 * 1024 * 1024


def _two_group_split(dims, ndim):
    """If dims[1:] == (s+1..ndim-1, 1..s) return s, else None.

    Such permutes (NCHW<->NHWC and friends) are a single batched 2-D transpose
    of shape (Bt, prod(axes 1..s), prod(axes s+1..)) -> swap the last two.
    """
    for s in range(1, ndim - 1):
        pattern = tuple(range(s + 1, ndim)) + tuple(range(1, s + 1))
        if tuple(dims[1:]) == pattern:
            return s
    return None


def _choose_batch_block(batch, per_batch_bytes, block_budget, hard_block_cap):
    """Batch block size for the dims[0]==0 path; None => fall back to XLA."""
    total = batch * per_batch_bytes
    bt = max(1, min(batch, block_budget // max(per_batch_bytes, 1)))
    # Keep >= 2 grid steps for arrays worth pipelining / megacore sharding.
    if total >= _MIN_PIPELINE_BYTES and batch >= 2:
        bt = min(bt, -(-batch // 2))
    if batch >= 8:
        bt = max(8, (bt // 8) * 8)       # sublane-aligned (8, .) output block
    else:
        bt = batch                       # full extent is always a legal block dim
    while bt > 8 and bt * per_batch_bytes > hard_block_cap:
        bt -= 8
    if bt * per_batch_bytes > hard_block_cap:
        return None                      # even the minimum block won't fit VMEM
    return bt


def _make_batch_kernel(dims, split):
    def kernel(x_ref, o_ref):
        x = x_ref[...]                                   # (Bt,) + x.shape[1:]
        bt = x.shape[0]
        if split is not None:
            g1 = math.prod(x.shape[1:split + 1])
            g2 = math.prod(x.shape[split + 1:])
            # TODO(synk): fuse transpose + fold into one pltpu.einshape
            # ("bgh->b(hg)") once grouped-equation support is confirmed, to
            # avoid the tile-boundary-crossing reshape relayout when g1 < 128.
            y = jnp.swapaxes(x.reshape(bt, g1, g2), 1, 2)
        else:
            y = jnp.transpose(x, dims)                   # dims[0] == 0
        o_ref[...] = y.reshape(o_ref.shape)              # lane-dense slab store
    return kernel


def _make_transpose_kernel(dims):
    def kernel(x_ref, o_ref):
        o_ref[...] = jnp.transpose(x_ref[...], dims).reshape(o_ref.shape)
    return kernel


def permute_pallas(x, dims, *, force_pallas=False, block_budget_bytes=None):
    """Pallas equivalent of torch.Tensor.permute(*dims)."""
    dims = tuple(int(d) for d in dims)
    assert len(dims) == x.ndim
    assert sorted(dims) == list(range(x.ndim)), "dims must be a permutation"

    if x.ndim <= 1 or dims == tuple(range(x.ndim)) or x.size == 0:
        return jnp.transpose(x, dims) if x.ndim > 1 else x

    itemsize = jnp.dtype(x.dtype).itemsize
    total_bytes = x.size * itemsize
    out_shape = tuple(x.shape[d] for d in dims)
    rest_flat = math.prod(out_shape[1:])

    # Small-input bypass: fixed pallas_call overhead would dominate.
    if not force_pallas and total_bytes <= _SMALL_BYPASS_BYTES:
        return jnp.transpose(x, dims)

    vmem_limit, block_budget = _budgets()
    if block_budget_bytes is not None:
        block_budget = int(block_budget_bytes)
    hard_block_cap = vmem_limit // 5     # in+out double-buffered (~4 blocks) + scratch

    cost = pl.CostEstimate(flops=0, transcendentals=0,
                           bytes_accessed=2 * total_bytes)

    if dims[0] == 0:
        # ---- main path: batch-major permute, grid over batch blocks ----
        batch = x.shape[0]
        per_batch_bytes = (x.size // batch) * itemsize
        bt = _choose_batch_block(batch, per_batch_bytes, block_budget, hard_block_cap)
        if bt is not None:
            split = _two_group_split(dims, x.ndim)
            n_trailing = x.ndim - 1
            in_block = (bt,) + x.shape[1:]
            slab = pl.pallas_call(
                _make_batch_kernel(dims, split),
                grid=(pl.cdiv(batch, bt),),
                out_shape=jax.ShapeDtypeStruct((batch, rest_flat), x.dtype),
                in_specs=[pl.BlockSpec(in_block,
                                       lambda b: (b,) + (0,) * n_trailing)],
                out_specs=pl.BlockSpec((bt, rest_flat), lambda b: (b, 0)),
                compiler_params=pltpu.CompilerParams(
                    dimension_semantics=("parallel",),
                    vmem_limit_bytes=vmem_limit),
                cost_estimate=cost,
            )(x)
            return slab.reshape(out_shape)
        # TODO(synk): tile inside a single batch element (needs an (8,128)-aligned
        # split of the permuted trailing axes); fall back to XLA's transpose.
        return jnp.transpose(x, dims)

    # ---- dims[0] != 0: the input axis that becomes the leading output axis ----
    a = dims[0]
    lead = x.shape[a]                       # == out_shape[0]
    per_lead_bytes = (x.size // lead) * itemsize

    if a <= x.ndim - 3:
        # Block 8 rows of axis `a` per grid step (unmasked 8-sublane stores);
        # axis `a` is not one of the last two input dims so alignment holds.
        ba = 8 if lead >= 8 else lead
        if ba * per_lead_bytes <= hard_block_cap:
            in_block = tuple(ba if i == a else x.shape[i] for i in range(x.ndim))

            def in_map(b, _a=a, _nd=x.ndim):
                return tuple(b if i == _a else 0 for i in range(_nd))

            slab = pl.pallas_call(
                _make_transpose_kernel(dims),
                grid=(pl.cdiv(lead, ba),),
                out_shape=jax.ShapeDtypeStruct((lead, rest_flat), x.dtype),
                in_specs=[pl.BlockSpec(in_block, in_map)],
                out_specs=pl.BlockSpec((ba, rest_flat), lambda b: (b, 0)),
                compiler_params=pltpu.CompilerParams(
                    dimension_semantics=("parallel",),
                    vmem_limit_bytes=vmem_limit),
                cost_estimate=cost,
            )(x)
            return slab.reshape(out_shape)

    # Leading output axis comes from one of the last two input axes (e.g. a plain
    # matrix transpose) or the per-row block is too big: small inputs get a single
    # lane-dense whole-array block, big ones go to XLA.
    if total_bytes <= block_budget:
        slab = pl.pallas_call(
            _make_transpose_kernel(dims),
            out_shape=jax.ShapeDtypeStruct((lead, rest_flat), x.dtype),
            compiler_params=pltpu.CompilerParams(vmem_limit_bytes=vmem_limit),
            cost_estimate=cost,
        )(x)
        return slab.reshape(out_shape)
    # TODO(synk): proper (8,128)-tiled 2-D transpose kernel for large last-axis permutes.
    return jnp.transpose(x, dims)


class Permute:
    """Mirror of the PyTorch module: stores dims, forward = permute."""

    def __init__(self, *dims) -> None:
        self.dims = dims

    def __call__(self, x):
        return permute_pallas(x, self.dims)

    forward = __call__


if __name__ == "__main__":
    key = jax.random.PRNGKey(0)
    k1, k2, k3, k4, k5 = jax.random.split(key, 5)

    # 1) NCHW -> NHWC (the common use around convs), forced through the Pallas
    #    two-group fast path at the module's natural small shape.
    x = jax.random.normal(k1, (2, 4, 16, 16), dtype=jnp.float32)
    out = jax.block_until_ready(permute_pallas(x, (0, 2, 3, 1), force_pallas=True))
    ref = jnp.transpose(x, (0, 2, 3, 1))
    assert out.shape == ref.shape and out.dtype == ref.dtype
    assert jnp.array_equal(out, ref), "NCHW->NHWC permute mismatch"

    # Module-style call (small input -> XLA bypass, same semantics).
    out_mod = jax.block_until_ready(Permute(0, 2, 3, 1)(x))
    assert jnp.array_equal(out_mod, ref)

    # 2) NHWC -> NCHW (two-group path, other direction).
    y = jax.random.normal(k2, (2, 16, 16, 4), dtype=jnp.float32)
    out2 = jax.block_until_ready(permute_pallas(y, (0, 3, 1, 2), force_pallas=True))
    assert jnp.array_equal(out2, jnp.transpose(y, (0, 3, 1, 2))), "NHWC->NCHW mismatch"

    # 3) Multi-step grid with multiple-of-8 batch blocks and a ragged last block
    #    (batch=20, bt=8 -> grid=cdiv(20,8)=3).
    z = jax.random.normal(k3, (20, 8, 16, 16), dtype=jnp.float32)
    out3 = jax.block_until_ready(
        permute_pallas(z, (0, 2, 3, 1), force_pallas=True,
                       block_budget_bytes=64 * 1024))
    assert jnp.array_equal(out3, jnp.transpose(z, (0, 2, 3, 1))), "ragged batch mismatch"

    # 4) dims[0] != 0 tiled path: 8 rows of the leading output axis per step.
    w = jax.random.normal(k4, (8, 16, 16, 16), dtype=jnp.float32)
    out4 = jax.block_until_ready(permute_pallas(w, (1, 0, 2, 3), force_pallas=True))
    assert jnp.array_equal(out4, jnp.transpose(w, (1, 0, 2, 3))), "axis-permute mismatch"

    # 5) Plain matrix transpose through the module (small -> bypass, semantics only).
    m = jax.random.normal(k5, (8, 128), dtype=jnp.float32)
    out5 = jax.block_until_ready(Permute(1, 0)(m))
    assert jnp.array_equal(out5, jnp.transpose(m, (1, 0))), "matrix transpose mismatch"

    print("KERNEL_OK")
</pallas_src>

<mosaic_0001>
module attributes {stable_mosaic.version = 11 : i64} {
  func.func @kernel(%arg0: i32, %arg1: memref<2x4x16x16xf32, #tpu.memory_space<vmem>>, %arg2: memref<2x1024xf32, #tpu.memory_space<vmem>>) attributes {dimension_semantics = [#tpu.dimension_semantics<parallel>], iteration_bounds = array<i64: 1>, scalar_prefetch = 0 : i64, scratch_operands = 0 : i64, tpu.core_type = #tpu.core_type<tc>, window_params = [{transform_indices = @transform_0, window_bounds = array<i64: 2, 4, 16, 16>}, {transform_indices = @transform_1, window_bounds = array<i64: 2, 1024>}]} {
    %c0 = arith.constant 0 : index
    %c0_0 = arith.constant 0 : index
    %c0_1 = arith.constant 0 : index
    %c0_2 = arith.constant 0 : index
    %0 = vector.load %arg1[%c0, %c0_0, %c0_1, %c0_2] : memref<2x4x16x16xf32, #tpu.memory_space<vmem>>, vector<2x4x16x16xf32>
    %1 = vector.shape_cast %0 : vector<2x4x16x16xf32> to vector<2x4x256xf32>
    %2 = tpu.transpose %1, [0, 2, 1] : vector<2x4x256xf32> -> vector<2x256x4xf32>
    %3 = vector.shape_cast %2 : vector<2x256x4xf32> to vector<2x1024xf32>
    %c0_3 = arith.constant 0 : index
    %c0_4 = arith.constant 0 : index
    %4 = vector.load %arg2[%c0_3, %c0_4] : memref<2x1024xf32, #tpu.memory_space<vmem>>, vector<2x1024xf32>
    tpu.vector_store %arg2[%c0_3, %c0_4], %3 {strides = array<i32>} : memref<2x1024xf32, #tpu.memory_space<vmem>>, vector<2x1024xf32>,
    return
  }
  func.func @transform_0(%arg0: i32) -> (i32, i32, i32, i32) {
    %c0_i32 = arith.constant 0 : i32
    %c0_i32_0 = arith.constant 0 : i32
    %c0_i32_1 = arith.constant 0 : i32
    %c0_i32_2 = arith.constant 0 : i32
    return %arg0, %c0_i32, %c0_i32_0, %c0_i32_1 : i32, i32, i32, i32
  }
  func.func @transform_1(%arg0: i32) -> (i32, i32) {
    %c0_i32 = arith.constant 0 : i32
    %c0_i32_0 = arith.constant 0 : i32
    return %arg0, %c0_i32 : i32, i32
  }
}

</mosaic_0001>

<llo_original>
// kernel: tpu_custom_call.1
$region0: #{tpu_custom_call.1}
  #allocation0 [shape = 'u32[]', space=smem, size = 0x4, offset = 0x4, fixed_abs, tag = 'smem constant byte address 0x4 - core index']
  #allocation1 [shape = 'u32[144,128]{1,0:T(1,128)}', space=vmem, size = 0x12000, scoped, tag = 'internal scratch']
  %s0 = inlined_call_operand.hbm [shape: f32[2,4,16,16], index: 0, kind: input, shape index: {}]
  %s1 = inlined_call_operand.hbm [shape: f32[2,1024], index: 1, kind: output, shape index: {}]
  %s2 = sld [smem:[#allocation0]]
  $region18: #{tpu_custom_call.1} parent=0
    _
  %s4 = ssub.s32 1, %s2
  %s5 = scalar_select 0, %s4, %s2
  $region1: #{tpu_custom_call.1} parent=0
    #allocation2 [shape = 'u8[65536]{0}', space=vmem, size = 0x10000, scoped, tag = 'input window, operand 0, single buffered']
    #allocation3 [shape = 's32[1]{0}', space=sflag, size = 0x4, scoped, tag = 'scoped memory for tpu_custom_call.1']
    #allocation4 [shape = 's32[1]{0}', space=sflag, size = 0x4, scoped, tag = 'scoped memory for tpu_custom_call.1']
    #allocation5 [shape = 'u8[8192]{0}', space=vmem, size = 0x2000, scoped, tag = 'output window, operand 0, single buffered']
    %6 = vsyncpa [#allocation3], 0
    %7 = vsyncpa [#allocation4], 0
    // Predicated region
    $region2: #{tpu_custom_call.1} parent=1 // pred_check
      _
    $region3: #{tpu_custom_call.1} parent=1 // pred_check_branch
      %9 = sbr.rel (0) target = $region5
    $region4: #{tpu_custom_call.1} parent=1 // pred_region
      %s11 = ssub.s32 2048, 2048
      %12 = vsyncadd [#allocation3], %s11
      %s13 = sshll.u32 [#allocation2], 4
      %s14 = int_to_ptr.vmem [resolvable:$true] %s13
      %19 = dma.hbm_to_vmem [thread:$0]  %s0, 2048, %s14, [#allocation3], 128, 128, 8
    $region5: #{tpu_custom_call.1} parent=1 // pred_fallthru
      _
    // Predicated region
    $region6: #{tpu_custom_call.1} parent=1 // pred_check
      _
    $region7: #{tpu_custom_call.1} parent=1 // pred_check_branch
      %21 = sbr.rel (0) target = $region9
    $region8: #{tpu_custom_call.1} parent=1 // pred_region
      %22 = dma.done [#allocation3], 2048
    $region9: #{tpu_custom_call.1} parent=1 // pred_fallthru
      _
    %v23 = vld [vmem:[#allocation2] sm:$0xff]
    %v24 = vld [vmem:[#allocation2 + $0x8] sm:$0xff]
    %v25 = vld [vmem:[#allocation2 + $0x10] sm:$0xff]
    %v26 = vld [vmem:[#allocation2 + $0x18] sm:$0xff]
    %v27 = vld [vmem:[#allocation2 + $0x20] sm:$0xff]
    %v28 = vld [vmem:[#allocation2 + $0x28] sm:$0xff]
    %v29 = vld [vmem:[#allocation2 + $0x30] sm:$0xff]
    %v30 = vld [vmem:[#allocation2 + $0x38] sm:$0xff]
    %v31 = vld [vmem:[#allocation2 + $0x40] sm:$0xff]
    %v32 = vld [vmem:[#allocation2 + $0x48] sm:$0xff]
    %v33 = vld [vmem:[#allocation2 + $0x50] sm:$0xff]
    %v34 = vld [vmem:[#allocation2 + $0x58] sm:$0xff]
    %v35 = vld [vmem:[#allocation2 + $0x60] sm:$0xff]
    %v36 = vld [vmem:[#allocation2 + $0x68] sm:$0xff]
    %v37 = vld [vmem:[#allocation2 + $0x70] sm:$0xff]
    %v38 = vld [vmem:[#allocation2 + $0x78] sm:$0xff]
    %v39 = vcombine.low %v23, %v27
    %v40 = vcombine.high %v23, %v27
    %v42 = vunpack.c.l.s4 1983009808
    %v43 = vunpack.c.0.s8 %v42
    %v44 = vlaneseq
    %v45 = vshrl.u32 %v44, 7
    %v46 = vsub.s32 %v43, %v45
    %v47 = vrot.slane %v39, %v46
    %v49 = vunpack.c.l.s4 1983009808
    %v50 = vunpack.c.0.s8 %v49
    %v51 = vlaneseq
    %v52 = vshrl.u32 %v51, 7
    %v53 = vsub.s32 %v50, %v52
    %v54 = vrot.slane %v40, %v53
    %v55 = vcombine.low %v25, %v29
    %v56 = vcombine.high %v25, %v29
    %v58 = vunpack.c.l.s4 1983009808
    %v59 = vunpack.c.0.s8 %v58
    %v60 = vlaneseq
    %v61 = vshrl.u32 %v60, 7
    %v62 = vsub.s32 %v59, %v61
    %v63 = vrot.slane %v55, %v62
    %v65 = vunpack.c.l.s4 1983009808
    %v66 = vunpack.c.0.s8 %v65
    %v67 = vlaneseq
    %v68 = vshrl.u32 %v67, 7
    %v69 = vsub.s32 %v66, %v68
    %v70 = vrot.slane %v56, %v69
    %v71 = vcombine.low %v47, %v63
    %v72 = vcombine.high %v47, %v63
    %v74 = vunpack.c.l.s4 1934713408
    %v75 = vunpack.c.0.s8 %v74
    %v76 = vlaneseq
    %v77 = vshrl.u32 %v76, 7
    %v78 = vsub.s32 %v75, %v77
    %v79 = vrot.slane %v71, %v78
    %v81 = vunpack.c.l.s4 1934713408
    %v82 = vunpack.c.0.s8 %v81
    %v83 = vlaneseq
    %v84 = vshrl.u32 %v83, 7
    %v85 = vsub.s32 %v82, %v84
    %v86 = vrot.slane %v72, %v85
    %v87 = vcombine.low %v54, %v70
    %v88 = vcombine.high %v54, %v70
    %v90 = vunpack.c.l.s4 1934713408
    %v91 = vunpack.c.0.s8 %v90
    %v92 = vlaneseq
    %v93 = vshrl.u32 %v92, 7
    %v94 = vsub.s32 %v91, %v93
    %v95 = vrot.slane %v87, %v94
    %v97 = vunpack.c.l.s4 1934713408
    %v98 = vunpack.c.0.s8 %v97
    %v99 = vlaneseq
    %v100 = vshrl.u32 %v99, 7
    %v101 = vsub.s32 %v98, %v100
    %v102 = vrot.slane %v88, %v101
    %v103 = vcombine.high %v79, 0.0
    %v104 = vcombine.high %v86, 0.0
    %v105 = vcombine.high %v95, 0.0
    %v106 = vcombine.high %v102, 0.0
    %v107 = vcombine.low %v24, %v28
    %v108 = vcombine.high %v24, %v28
    %v110 = vunpack.c.l.s4 1983009808
    %v111 = vunpack.c.0.s8 %v110
    %v112 = vlaneseq
    %v113 = vshrl.u32 %v112, 7
    %v114 = vsub.s32 %v111, %v113
    %v115 = vrot.slane %v107, %v114
    %v117 = vunpack.c.l.s4 1983009808
    %v118 = vunpack.c.0.s8 %v117
    %v119 = vlaneseq
    %v120 = vshrl.u32 %v119, 7
    %v121 = vsub.s32 %v118, %v120
    %v122 = vrot.slane %v108, %v121
    %v123 = vcombine.low %v26, %v30
    %v124 = vcombine.high %v26, %v30
    %v126 = vunpack.c.l.s4 1983009808
    %v127 = vunpack.c.0.s8 %v126
    %v128 = vlaneseq
    %v129 = vshrl.u32 %v128, 7
    %v130 = vsub.s32 %v127, %v129
    %v131 = vrot.slane %v123, %v130
    %v133 = vunpack.c.l.s4 1983009808
    %v134 = vunpack.c.0.s8 %v133
    %v135 = vlaneseq
    %v136 = vshrl.u32 %v135, 7
    %v137 = vsub.s32 %v134, %v136
    %v138 = vrot.slane %v124, %v137
    %v139 = vcombine.low %v115, %v131
    %v140 = vcombine.high %v115, %v131
    %v142 = vunpack.c.l.s4 1934713408
    %v143 = vunpack.c.0.s8 %v142
    %v144 = vlaneseq
    %v145 = vshrl.u32 %v144, 7
    %v146 = vsub.s32 %v143, %v145
    %v147 = vrot.slane %v139, %v146
    %v149 = vunpack.c.l.s4 1934713408
    %v150 = vunpack.c.0.s8 %v149
    %v151 = vlaneseq
    %v152 = vshrl.u32 %v151, 7
    %v153 = vsub.s32 %v150, %v152
    %v154 = vrot.slane %v140, %v153
    %v155 = vcombine.low %v122, %v138
    %v156 = vcombine.high %v122, %v138
    %v158 = vunpack.c.l.s4 1934713408
    %v159 = vunpack.c.0.s8 %v158
    %v160 = vlaneseq
    %v161 = vshrl.u32 %v160, 7
    %v162 = vsub.s32 %v159, %v161
    %v163 = vrot.slane %v155, %v162
    %v165 = vunpack.c.l.s4 1934713408
    %v166 = vunpack.c.0.s8 %v165
    %v167 = vlaneseq
    %v168 = vshrl.u32 %v167, 7
    %v169 = vsub.s32 %v166, %v168
    %v170 = vrot.slane %v156, %v169
    %v171 = vcombine.high %v147, 0.0
    %v172 = vcombine.high %v154, 0.0
    %v173 = vcombine.high %v163, 0.0
    %v174 = vcombine.high %v170, 0.0
    %v175 = vcombine.low %v31, %v35
    %v176 = vcombine.high %v31, %v35
    %v178 = vunpack.c.l.s4 1983009808
    %v179 = vunpack.c.0.s8 %v178
    %v180 = vlaneseq
    %v181 = vshrl.u32 %v180, 7
    %v182 = vsub.s32 %v179, %v181
    %v183 = vrot.slane %v175, %v182
    %v185 = vunpack.c.l.s4 1983009808
    %v186 = vunpack.c.0.s8 %v185
    %v187 = vlaneseq
    %v188 = vshrl.u32 %v187, 7
    %v189 = vsub.s32 %v186, %v188
    %v190 = vrot.slane %v176, %v189
    %v191 = vcombine.low %v33, %v37
    %v192 = vcombine.high %v33, %v37
    %v194 = vunpack.c.l.s4 1983009808
    %v195 = vunpack.c.0.s8 %v194
    %v196 = vlaneseq
    %v197 = vshrl.u32 %v196, 7
    %v198 = vsub.s32 %v195, %v197
    %v199 = vrot.slane %v191, %v198
    %v201 = vunpack.c.l.s4 1983009808
    %v202 = vunpack.c.0.s8 %v201
    %v203 = vlaneseq
    %v204 = vshrl.u32 %v203, 7
    %v205 = vsub.s32 %v202, %v204
    %v206 = vrot.slane %v192, %v205
    %v207 = vcombine.low %v183, %v199
    %v208 = vcombine.high %v183, %v199
    %v210 = vunpack.c.l.s4 1934713408
    %v211 = vunpack.c.0.s8 %v210
    %v212 = vlaneseq
    %v213 = vshrl.u32 %v212, 7
    %v214 = vsub.s32 %v211, %v213
    %v215 = vrot.slane %v207, %v214
    %v217 = vunpack.c.l.s4 1934713408
    %v218 = vunpack.c.0.s8 %v217
    %v219 = vlaneseq
    %v220 = vshrl.u32 %v219, 7
    %v221 = vsub.s32 %v218, %v220
    %v222 = vrot.slane %v208, %v221
    %v223 = vcombine.low %v190, %v206
    %v224 = vcombine.high %v190, %v206
    %v226 = vunpack.c.l.s4 1934713408
    %v227 = vunpack.c.0.s8 %v226
    %v228 = vlaneseq
    %v229 = vshrl.u32 %v228, 7
    %v230 = vsub.s32 %v227, %v229
    %v231 = vrot.slane %v223, %v230
    %v233 = vunpack.c.l.s4 1934713408
    %v234 = vunpack.c.0.s8 %v233
    %v235 = vlaneseq
    %v236 = vshrl.u32 %v235, 7
    %v237 = vsub.s32 %v234, %v236
    %v238 = vrot.slane %v224, %v237
    %v239 = vcombine.high %v215, 0.0
    %v240 = vcombine.high %v222, 0.0
    %v241 = vcombine.high %v231, 0.0
    %v242 = vcombine.high %v238, 0.0
    %v243 = vcombine.low %v32, %v36
    %v244 = vcombine.high %v32, %v36
    %v246 = vunpack.c.l.s4 1983009808
    %v247 = vunpack.c.0.s8 %v246
    %v248 = vlaneseq
    %v249 = vshrl.u32 %v248, 7
    %v250 = vsub.s32 %v247, %v249
    %v251 = vrot.slane %v243, %v250
    %v253 = vunpack.c.l.s4 1983009808
    %v254 = vunpack.c.0.s8 %v253
    %v255 = vlaneseq
    %v256 = vshrl.u32 %v255, 7
    %v257 = vsub.s32 %v254, %v256
    %v258 = vrot.slane %v244, %v257
    %v259 = vcombine.low %v34, %v38
    %v260 = vcombine.high %v34, %v38
    %v262 = vunpack.c.l.s4 1983009808
    %v263 = vunpack.c.0.s8 %v262
    %v264 = vlaneseq
    %v265 = vshrl.u32 %v264, 7
    %v266 = vsub.s32 %v263, %v265
    %v267 = vrot.slane %v259, %v266
    %v269 = vunpack.c.l.s4 1983009808
    %v270 = vunpack.c.0.s8 %v269
    %v271 = vlaneseq
    %v272 = vshrl.u32 %v271, 7
    %v273 = vsub.s32 %v270, %v272
    %v274 = vrot.slane %v260, %v273
    %v275 = vcombine.low %v251, %v267
    %v276 = vcombine.high %v251, %v267
    %v278 = vunpack.c.l.s4 1934713408
    %v279 = vunpack.c.0.s8 %v278
    %v280 = vlaneseq
    %v281 = vshrl.u32 %v280, 7
    %v282 = vsub.s32 %v279, %v281
    %v283 = vrot.slane %v275, %v282
    %v285 = vunpack.c.l.s4 1934713408
    %v286 = vunpack.c.0.s8 %v285
    %v287 = vlaneseq
    %v288 = vshrl.u32 %v287, 7
    %v289 = vsub.s32 %v286, %v288
    %v290 = vrot.slane %v276, %v289
    %v291 = vcombine.low %v258, %v274
    %v292 = vcombine.high %v258, %v274
    %v294 = vunpack.c.l.s4 1934713408
    %v295 = vunpack.c.0.s8 %v294
    %v296 = vlaneseq
    %v297 = vshrl.u32 %v296, 7
    %v298 = vsub.s32 %v295, %v297
    %v299 = vrot.slane %v291, %v298
    %v301 = vunpack.c.l.s4 1934713408
    %v302 = vunpack.c.0.s8 %v301
    %v303 = vlaneseq
    %v304 = vshrl.u32 %v303, 7
    %v305 = vsub.s32 %v302, %v304
    %v306 = vrot.slane %v292, %v305
    %v307 = vcombine.high %v283, 0.0
    %v308 = vcombine.high %v290, 0.0
    %v309 = vcombine.high %v299, 0.0
    %v310 = vcombine.high %v306, 0.0
    %313 = vrot.lane.b32.xlu0 %v103, 16
    %v314 = vpop.permute.xlu0 %313
    %315 = vrot.lane.b32.xlu0 %v239, 16
    %v316 = vpop.permute.xlu0 %315
    %321 = vrot.lane.b32.xlu0 %v86, 32
    %v322 = vpop.permute.xlu0 %321
    %323 = vrot.lane.b32.xlu0 %v222, 32
    %v324 = vpop.permute.xlu0 %323
    %329 = vrot.lane.b32.xlu0 %v104, 48
    %v330 = vpop.permute.xlu0 %329
    %331 = vrot.lane.b32.xlu0 %v240, 48
    %v332 = vpop.permute.xlu0 %331
    %337 = vrot.lane.b32.xlu0 %v95, 64
    %v338 = vpop.permute.xlu0 %337
    %339 = vrot.lane.b32.xlu0 %v231, 64
    %v340 = vpop.permute.xlu0 %339
    %345 = vrot.lane.b32.xlu0 %v105, 80
    %v346 = vpop.permute.xlu0 %345
    %347 = vrot.lane.b32.xlu0 %v241, 80
    %v348 = vpop.permute.xlu0 %347
    %353 = vrot.lane.b32.xlu0 %v102, 96
    %v354 = vpop.permute.xlu0 %353
    %355 = vrot.lane.b32.xlu0 %v238, 96
    %v356 = vpop.permute.xlu0 %355
    %361 = vrot.lane.b32.xlu0 %v106, 112
    %v362 = vpop.permute.xlu0 %361
    %363 = vrot.lane.b32.xlu0 %v242, 112
    %v364 = vpop.permute.xlu0 %363
    %369 = vrot.lane.b32.xlu0 %v171, 16
    %v370 = vpop.permute.xlu0 %369
    %371 = vrot.lane.b32.xlu0 %v307, 16
    %v372 = vpop.permute.xlu0 %371
    %377 = vrot.lane.b32.xlu0 %v154, 32
    %v378 = vpop.permute.xlu0 %377
    %379 = vrot.lane.b32.xlu0 %v290, 32
    %v380 = vpop.permute.xlu0 %379
    %385 = vrot.lane.b32.xlu0 %v172, 48
    %v386 = vpop.permute.xlu0 %385
    %387 = vrot.lane.b32.xlu0 %v308, 48
    %v388 = vpop.permute.xlu0 %387
    %393 = vrot.lane.b32.xlu0 %v163, 64
    %v394 = vpop.permute.xlu0 %393
    %395 = vrot.lane.b32.xlu0 %v299, 64
    %v396 = vpop.permute.xlu0 %395
    %401 = vrot.lane.b32.xlu0 %v173, 80
    %v402 = vpop.permute.xlu0 %401
    %403 = vrot.lane.b32.xlu0 %v309, 80
    %v404 = vpop.permute.xlu0 %403
    %409 = vrot.lane.b32.xlu0 %v170, 96
    %v410 = vpop.permute.xlu0 %409
    %411 = vrot.lane.b32.xlu0 %v306, 96
    %v412 = vpop.permute.xlu0 %411
    %417 = vrot.lane.b32.xlu0 %v174, 112
    %v418 = vpop.permute.xlu0 %417
    %419 = vrot.lane.b32.xlu0 %v310, 112
    %v420 = vpop.permute.xlu0 %419
    %vm423 = vcmask 130048
    %v424 = vsel %vm423, %v79, %v314
    %v425 = vsel %vm423, %v215, %v316
    %vm426 = vcmask 261120
    %v427 = vsel %vm426, %v424, %v322
    %v428 = vsel %vm426, %v425, %v324
    %vm429 = vcmask 392192
    %v430 = vsel %vm429, %v427, %v330
    %v431 = vsel %vm429, %v428, %v332
    %vm432 = vcmask 523264
    %v433 = vsel %vm432, %v430, %v338
    %v434 = vsel %vm432, %v431, %v340
    %vm435 = vcmask 654336
    %v436 = vsel %vm435, %v433, %v346
    %v437 = vsel %vm435, %v434, %v348
    %vm438 = vcmask 785408
    %v439 = vsel %vm438, %v436, %v354
    %v440 = vsel %vm438, %v437, %v356
    %vm441 = vcmask 916480
    %v442 = vsel %vm441, %v439, %v362
    %v443 = vsel %vm441, %v440, %v364
    %v444 = vsel %vm423, %v147, %v370
    %v445 = vsel %vm423, %v283, %v372
    %v446 = vsel %vm426, %v444, %v378
    %v447 = vsel %vm426, %v445, %v380
    %v448 = vsel %vm429, %v446, %v386
    %v449 = vsel %vm429, %v447, %v388
    %v450 = vsel %vm432, %v448, %v394
    %v451 = vsel %vm432, %v449, %v396
    %v452 = vsel %vm435, %v450, %v402
    %v453 = vsel %vm435, %v451, %v404
    %v454 = vsel %vm438, %v452, %v410
    %v455 = vsel %vm438, %v453, %v412
    %v456 = vsel %vm441, %v454, %v418
    %v457 = vsel %vm441, %v455, %v420
    %458 = vxpose.xlu0.b32.start [1/16] %v442, 128
    %459 = vxpose.xlu0.b32.cont [2/16] 0.0, 128
    %460 = vxpose.xlu0.b32.cont [3/16] 0.0, 128
    %461 = vxpose.xlu0.b32.cont [4/16] 0.0, 128
    %462 = vxpose.xlu0.b32.cont [5/16] 0.0, 128
    %463 = vxpose.xlu0.b32.cont [6/16] 0.0, 128
    %464 = vxpose.xlu0.b32.cont [7/16] 0.0, 128
    %465 = vxpose.xlu0.b32.cont [8/16] 0.0, 128
    %466 = vxpose.xlu0.b32.cont [9/16] 0.0, 128
    %467 = vxpose.xlu0.b32.cont [10/16] 0.0, 128
    %468 = vxpose.xlu0.b32.cont [11/16] 0.0, 128
    %469 = vxpose.xlu0.b32.cont [12/16] 0.0, 128
    %470 = vxpose.xlu0.b32.cont [13/16] 0.0, 128
    %471 = vxpose.xlu0.b32.cont [14/16] 0.0, 128
    %472 = vxpose.xlu0.b32.cont [15/16] 0.0, 128
    %473 = vxpose.xlu0.b32.end [16/16] 0.0, 128
    %v474 = vpop.trf.xlu0
    %v475 = vpop.trf.xlu0
    %v476 = vpop.trf.xlu0
    %v477 = vpop.trf.xlu0
    %v478 = vpop.trf.xlu0
    %v479 = vpop.trf.xlu0
    %v480 = vpop.trf.xlu0
    %v481 = vpop.trf.xlu0
    %v482 = vpop.trf.xlu0
    %v483 = vpop.trf.xlu0
    %v484 = vpop.trf.xlu0
    %v485 = vpop.trf.xlu0
    %v486 = vpop.trf.xlu0
    %v487 = vpop.trf.xlu0
    %v488 = vpop.trf.xlu0
    %v489 = vpop.trf.xlu0
    %490 = vxpose.xlu0.b32.start [1/16] %v456, 128
    %491 = vxpose.xlu0.b32.cont [2/16] 0.0, 128
    %492 = vxpose.xlu0.b32.cont [3/16] 0.0, 128
    %493 = vxpose.xlu0.b32.cont [4/16] 0.0, 128
    %494 = vxpose.xlu0.b32.cont [5/16] 0.0, 128
    %495 = vxpose.xlu0.b32.cont [6/16] 0.0, 128
    %496 = vxpose.xlu0.b32.cont [7/16] 0.0, 128
    %497 = vxpose.xlu0.b32.cont [8/16] 0.0, 128
    %498 = vxpose.xlu0.b32.cont [9/16] 0.0, 128
    %499 = vxpose.xlu0.b32.cont [10/16] 0.0, 128
    %500 = vxpose.xlu0.b32.cont [11/16] 0.0, 128
    %501 = vxpose.xlu0.b32.cont [12/16] 0.0, 128
    %502 = vxpose.xlu0.b32.cont [13/16] 0.0, 128
    %503 = vxpose.xlu0.b32.cont [14/16] 0.0, 128
    %504 = vxpose.xlu0.b32.cont [15/16] 0.0, 128
    %505 = vxpose.xlu0.b32.end [16/16] 0.0, 128
    %v506 = vpop.trf.xlu0
    %v507 = vpop.trf.xlu0
    %v508 = vpop.trf.xlu0
    %v509 = vpop.trf.xlu0
    %v510 = vpop.trf.xlu0
    %v511 = vpop.trf.xlu0
    %v512 = vpop.trf.xlu0
    %v513 = vpop.trf.xlu0
    %v514 = vpop.trf.xlu0
    %v515 = vpop.trf.xlu0
    %v516 = vpop.trf.xlu0
    %v517 = vpop.trf.xlu0
    %v518 = vpop.trf.xlu0
    %v519 = vpop.trf.xlu0
    %v520 = vpop.trf.xlu0
    %v521 = vpop.trf.xlu0
    %522 = vxpose.xlu0.b32.start [1/16] %v443, 128
    %523 = vxpose.xlu0.b32.cont [2/16] 0.0, 128
    %524 = vxpose.xlu0.b32.cont [3/16] 0.0, 128
    %525 = vxpose.xlu0.b32.cont [4/16] 0.0, 128
    %526 = vxpose.xlu0.b32.cont [5/16] 0.0, 128
    %527 = vxpose.xlu0.b32.cont [6/16] 0.0, 128
    %528 = vxpose.xlu0.b32.cont [7/16] 0.0, 128
    %529 = vxpose.xlu0.b32.cont [8/16] 0.0, 128
    %530 = vxpose.xlu0.b32.cont [9/16] 0.0, 128
    %531 = vxpose.xlu0.b32.cont [10/16] 0.0, 128
    %532 = vxpose.xlu0.b32.cont [11/16] 0.0, 128
    %533 = vxpose.xlu0.b32.cont [12/16] 0.0, 128
    %534 = vxpose.xlu0.b32.cont [13/16] 0.0, 128
    %535 = vxpose.xlu0.b32.cont [14/16] 0.0, 128
    %536 = vxpose.xlu0.b32.cont [15/16] 0.0, 128
    %537 = vxpose.xlu0.b32.end [16/16] 0.0, 128
    %v538 = vpop.trf.xlu0
    %v539 = vpop.trf.xlu0
    %v540 = vpop.trf.xlu0
    %v541 = vpop.trf.xlu0
    %v542 = vpop.trf.xlu0
    %v543 = vpop.trf.xlu0
    %v544 = vpop.trf.xlu0
    %v545 = vpop.trf.xlu0
    %v546 = vpop.trf.xlu0
    %v547 = vpop.trf.xlu0
    %v548 = vpop.trf.xlu0
    %v549 = vpop.trf.xlu0
    %v550 = vpop.trf.xlu0
    %v551 = vpop.trf.xlu0
    %v552 = vpop.trf.xlu0
    %v553 = vpop.trf.xlu0
    %554 = vxpose.xlu0.b32.start [1/16] %v457, 128
    %555 = vxpose.xlu0.b32.cont [2/16] 0.0, 128
    %556 = vxpose.xlu0.b32.cont [3/16] 0.0, 128
    %557 = vxpose.xlu0.b32.cont [4/16] 0.0, 128
    %558 = vxpose.xlu0.b32.cont [5/16] 0.0, 128
    %559 = vxpose.xlu0.b32.cont [6/16] 0.0, 128
    %560 = vxpose.xlu0.b32.cont [7/16] 0.0, 128
    %561 = vxpose.xlu0.b32.cont [8/16] 0.0, 128
    %562 = vxpose.xlu0.b32.cont [9/16] 0.0, 128
    %563 = vxpose.xlu0.b32.cont [10/16] 0.0, 128
    %564 = vxpose.xlu0.b32.cont [11/16] 0.0, 128
    %565 = vxpose.xlu0.b32.cont [12/16] 0.0, 128
    %566 = vxpose.xlu0.b32.cont [13/16] 0.0, 128
    %567 = vxpose.xlu0.b32.cont [14/16] 0.0, 128
    %568 = vxpose.xlu0.b32.cont [15/16] 0.0, 128
    %569 = vxpose.xlu0.b32.end [16/16] 0.0, 128
    %v570 = vpop.trf.xlu0
    %v571 = vpop.trf.xlu0
    %v572 = vpop.trf.xlu0
    %v573 = vpop.trf.xlu0
    %v574 = vpop.trf.xlu0
    %v575 = vpop.trf.xlu0
    %v576 = vpop.trf.xlu0
    %v577 = vpop.trf.xlu0
    %v578 = vpop.trf.xlu0
    %v579 = vpop.trf.xlu0
    %v580 = vpop.trf.xlu0
    %v581 = vpop.trf.xlu0
    %v582 = vpop.trf.xlu0
    %v583 = vpop.trf.xlu0
    %v584 = vpop.trf.xlu0
    %v585 = vpop.trf.xlu0
    %v586 = vcombine.high %v474, 0.0
    %v588 = vunpack.c.l.s4 1983009808
    %v589 = vunpack.c.0.s8 %v588
    %v590 = vlaneseq
    %v591 = vshrl.u32 %v590, 7
    %v592 = vsub.s32 %v589, %v591
    %v593 = vrot.slane %v474, %v592
    %v595 = vunpack.c.l.s4 1983009808
    %v596 = vunpack.c.0.s8 %v595
    %v597 = vlaneseq
    %v598 = vshrl.u32 %v597, 7
    %v599 = vsub.s32 %v596, %v598
    %v600 = vrot.slane %v586, %v599
    %v601 = vcombine.high %v538, 0.0
    %v603 = vunpack.c.l.s4 1983009808
    %v604 = vunpack.c.0.s8 %v603
    %v605 = vlaneseq
    %v606 = vshrl.u32 %v605, 7
    %v607 = vsub.s32 %v604, %v606
    %v608 = vrot.slane %v538, %v607
    %v610 = vunpack.c.l.s4 1983009808
    %v611 = vunpack.c.0.s8 %v610
    %v612 = vlaneseq
    %v613 = vshrl.u32 %v612, 7
    %v614 = vsub.s32 %v611, %v613
    %v615 = vrot.slane %v601, %v614
    %v616 = vcombine.low %v593, %v608
    %v617 = vcombine.high %v593, %v608
    %v619 = vunpack.c.l.s4 1934713408
    %v620 = vunpack.c.0.s8 %v619
    %v621 = vlaneseq
    %v622 = vshrl.u32 %v621, 7
    %v623 = vsub.s32 %v620, %v622
    %v624 = vrot.slane %v616, %v623
    %v626 = vunpack.c.l.s4 1934713408
    %v627 = vunpack.c.0.s8 %v626
    %v628 = vlaneseq
    %v629 = vshrl.u32 %v628, 7
    %v630 = vsub.s32 %v627, %v629
    %v631 = vrot.slane %v617, %v630
    %v632 = vcombine.low %v600, %v615
    %v633 = vcombine.high %v600, %v615
    %v635 = vunpack.c.l.s4 1934713408
    %v636 = vunpack.c.0.s8 %v635
    %v637 = vlaneseq
    %v638 = vshrl.u32 %v637, 7
    %v639 = vsub.s32 %v636, %v638
    %v640 = vrot.slane %v632, %v639
    %v642 = vunpack.c.l.s4 1934713408
    %v643 = vunpack.c.0.s8 %v642
    %v644 = vlaneseq
    %v645 = vshrl.u32 %v644, 7
    %v646 = vsub.s32 %v643, %v645
    %v647 = vrot.slane %v633, %v646
    %v648 = vcombine.high %v624, 0.0
    %v649 = vcombine.high %v631, 0.0
    %v650 = vcombine.high %v640, 0.0
    %v651 = vcombine.high %v647, 0.0
    %v652 = vcombine.high %v475, 0.0
    %v654 = vunpack.c.l.s4 1983009808
    %v655 = vunpack.c.0.s8 %v654
    %v656 = vlaneseq
    %v657 = vshrl.u32 %v656, 7
    %v658 = vsub.s32 %v655, %v657
    %v659 = vrot.slane %v475, %v658
    %v661 = vunpack.c.l.s4 1983009808
    %v662 = vunpack.c.0.s8 %v661
    %v663 = vlaneseq
    %v664 = vshrl.u32 %v663, 7
    %v665 = vsub.s32 %v662, %v664
    %v666 = vrot.slane %v652, %v665
    %v667 = vcombine.high %v539, 0.0
    %v669 = vunpack.c.l.s4 1983009808
    %v670 = vunpack.c.0.s8 %v669
    %v671 = vlaneseq
    %v672 = vshrl.u32 %v671, 7
    %v673 = vsub.s32 %v670, %v672
    %v674 = vrot.slane %v539, %v673
    %v676 = vunpack.c.l.s4 1983009808
    %v677 = vunpack.c.0.s8 %v676
    %v678 = vlaneseq
    %v679 = vshrl.u32 %v678, 7
    %v680 = vsub.s32 %v677, %v679
    %v681 = vrot.slane %v667, %v680
    %v682 = vcombine.low %v659, %v674
    %v683 = vcombine.high %v659, %v674
    %v685 = vunpack.c.l.s4 1934713408
    %v686 = vunpack.c.0.s8 %v685
    %v687 = vlaneseq
    %v688 = vshrl.u32 %v687, 7
    %v689 = vsub.s32 %v686, %v688
    %v690 = vrot.slane %v682, %v689
    %v692 = vunpack.c.l.s4 1934713408
    %v693 = vunpack.c.0.s8 %v692
    %v694 = vlaneseq
    %v695 = vshrl.u32 %v694, 7
    %v696 = vsub.s32 %v693, %v695
    %v697 = vrot.slane %v683, %v696
    %v698 = vcombine.low %v666, %v681
    %v699 = vcombine.high %v666, %v681
    %v701 = vunpack.c.l.s4 1934713408
    %v702 = vunpack.c.0.s8 %v701
    %v703 = vlaneseq
    %v704 = vshrl.u32 %v703, 7
    %v705 = vsub.s32 %v702, %v704
    %v706 = vrot.slane %v698, %v705
    %v708 = vunpack.c.l.s4 1934713408
    %v709 = vunpack.c.0.s8 %v708
    %v710 = vlaneseq
    %v711 = vshrl.u32 %v710, 7
    %v712 = vsub.s32 %v709, %v711
    %v713 = vrot.slane %v699, %v712
    %v714 = vcombine.high %v690, 0.0
    %v715 = vcombine.high %v697, 0.0
    %v716 = vcombine.high %v706, 0.0
    %v717 = vcombine.high %v713, 0.0
    %v718 = vcombine.high %v476, 0.0
    %v720 = vunpack.c.l.s4 1983009808
    %v721 = vunpack.c.0.s8 %v720
    %v722 = vlaneseq
    %v723 = vshrl.u32 %v722, 7
    %v724 = vsub.s32 %v721, %v723
    %v725 = vrot.slane %v476, %v724
    %v727 = vunpack.c.l.s4 1983009808
    %v728 = vunpack.c.0.s8 %v727
    %v729 = vlaneseq
    %v730 = vshrl.u32 %v729, 7
    %v731 = vsub.s32 %v728, %v730
    %v732 = vrot.slane %v718, %v731
    %v733 = vcombine.high %v540, 0.0
    %v735 = vunpack.c.l.s4 1983009808
    %v736 = vunpack.c.0.s8 %v735
    %v737 = vlaneseq
    %v738 = vshrl.u32 %v737, 7
    %v739 = vsub.s32 %v736, %v738
    %v740 = vrot.slane %v540, %v739
    %v742 = vunpack.c.l.s4 1983009808
    %v743 = vunpack.c.0.s8 %v742
    %v744 = vlaneseq
    %v745 = vshrl.u32 %v744, 7
    %v746 = vsub.s32 %v743, %v745
    %v747 = vrot.slane %v733, %v746
    %v748 = vcombine.low %v725, %v740
    %v749 = vcombine.high %v725, %v740
    %v751 = vunpack.c.l.s4 1934713408
    %v752 = vunpack.c.0.s8 %v751
    %v753 = vlaneseq
    %v754 = vshrl.u32 %v753, 7
    %v755 = vsub.s32 %v752, %v754
    %v756 = vrot.slane %v748, %v755
    %v758 = vunpack.c.l.s4 1934713408
    %v759 = vunpack.c.0.s8 %v758
    %v760 = vlaneseq
    %v761 = vshrl.u32 %v760, 7
    %v762 = vsub.s32 %v759, %v761
    %v763 = vrot.slane %v749, %v762
    %v764 = vcombine.low %v732, %v747
    %v765 = vcombine.high %v732, %v747
    %v767 = vunpack.c.l.s4 1934713408
    %v768 = vunpack.c.0.s8 %v767
    %v769 = vlaneseq
    %v770 = vshrl.u32 %v769, 7
    %v771 = vsub.s32 %v768, %v770
    %v772 = vrot.slane %v764, %v771
    %v774 = vunpack.c.l.s4 1934713408
    %v775 = vunpack.c.0.s8 %v774
    %v776 = vlaneseq
    %v777 = vshrl.u32 %v776, 7
    %v778 = vsub.s32 %v775, %v777
    %v779 = vrot.slane %v765, %v778
    %v780 = vcombine.high %v756, 0.0
    %v781 = vcombine.high %v763, 0.0
    %v782 = vcombine.high %v772, 0.0
    %v783 = vcombine.high %v779, 0.0
    %v784 = vcombine.high %v477, 0.0
    %v786 = vunpack.c.l.s4 1983009808
    %v787 = vunpack.c.0.s8 %v786
    %v788 = vlaneseq
    %v789 = vshrl.u32 %v788, 7
    %v790 = vsub.s32 %v787, %v789
    %v791 = vrot.slane %v477, %v790
    %v793 = vunpack.c.l.s4 1983009808
    %v794 = vunpack.c.0.s8 %v793
    %v795 = vlaneseq
    %v796 = vshrl.u32 %v795, 7
    %v797 = vsub.s32 %v794, %v796
    %v798 = vrot.slane %v784, %v797
    %v799 = vcombine.high %v541, 0.0
    %v801 = vunpack.c.l.s4 1983009808
    %v802 = vunpack.c.0.s8 %v801
    %v803 = vlaneseq
    %v804 = vshrl.u32 %v803, 7
    %v805 = vsub.s32 %v802, %v804
    %v806 = vrot.slane %v541, %v805
    %v808 = vunpack.c.l.s4 1983009808
    %v809 = vunpack.c.0.s8 %v808
    %v810 = vlaneseq
    %v811 = vshrl.u32 %v810, 7
    %v812 = vsub.s32 %v809, %v811
    %v813 = vrot.slane %v799, %v812
    %v814 = vcombine.low %v791, %v806
    %v815 = vcombine.high %v791, %v806
    %v817 = vunpack.c.l.s4 1934713408
    %v818 = vunpack.c.0.s8 %v817
    %v819 = vlaneseq
    %v820 = vshrl.u32 %v819, 7
    %v821 = vsub.s32 %v818, %v820
    %v822 = vrot.slane %v814, %v821
    %v824 = vunpack.c.l.s4 1934713408
    %v825 = vunpack.c.0.s8 %v824
    %v826 = vlaneseq
    %v827 = vshrl.u32 %v826, 7
    %v828 = vsub.s32 %v825, %v827
    %v829 = vrot.slane %v815, %v828
    %v830 = vcombine.low %v798, %v813
    %v831 = vcombine.high %v798, %v813
    %v833 = vunpack.c.l.s4 1934713408
    %v834 = vunpack.c.0.s8 %v833
    %v835 = vlaneseq
    %v836 = vshrl.u32 %v835, 7
    %v837 = vsub.s32 %v834, %v836
    %v838 = vrot.slane %v830, %v837
    %v840 = vunpack.c.l.s4 1934713408
    %v841 = vunpack.c.0.s8 %v840
    %v842 = vlaneseq
    %v843 = vshrl.u32 %v842, 7
    %v844 = vsub.s32 %v841, %v843
    %v845 = vrot.slane %v831, %v844
    %v846 = vcombine.high %v822, 0.0
    %v847 = vcombine.high %v829, 0.0
    %v848 = vcombine.high %v838, 0.0
    %v849 = vcombine.high %v845, 0.0
    %v850 = vcombine.high %v478, 0.0
    %v852 = vunpack.c.l.s4 1983009808
    %v853 = vunpack.c.0.s8 %v852
    %v854 = vlaneseq
    %v855 = vshrl.u32 %v854, 7
    %v856 = vsub.s32 %v853, %v855
    %v857 = vrot.slane %v478, %v856
    %v859 = vunpack.c.l.s4 1983009808
    %v860 = vunpack.c.0.s8 %v859
    %v861 = vlaneseq
    %v862 = vshrl.u32 %v861, 7
    %v863 = vsub.s32 %v860, %v862
    %v864 = vrot.slane %v850, %v863
    %v865 = vcombine.high %v542, 0.0
    %v867 = vunpack.c.l.s4 1983009808
    %v868 = vunpack.c.0.s8 %v867
    %v869 = vlaneseq
    %v870 = vshrl.u32 %v869, 7
    %v871 = vsub.s32 %v868, %v870
    %v872 = vrot.slane %v542, %v871
    %v874 = vunpack.c.l.s4 1983009808
    %v875 = vunpack.c.0.s8 %v874
    %v876 = vlaneseq
    %v877 = vshrl.u32 %v876, 7
    %v878 = vsub.s32 %v875, %v877
    %v879 = vrot.slane %v865, %v878
    %v880 = vcombine.low %v857, %v872
    %v881 = vcombine.high %v857, %v872
    %v883 = vunpack.c.l.s4 1934713408
    %v884 = vunpack.c.0.s8 %v883
    %v885 = vlaneseq
    %v886 = vshrl.u32 %v885, 7
    %v887 = vsub.s32 %v884, %v886
    %v888 = vrot.slane %v880, %v887
    %v890 = vunpack.c.l.s4 1934713408
    %v891 = vunpack.c.0.s8 %v890
    %v892 = vlaneseq
    %v893 = vshrl.u32 %v892, 7
    %v894 = vsub.s32 %v891, %v893
    %v895 = vrot.slane %v881, %v894
    %v896 = vcombine.low %v864, %v879
    %v897 = vcombine.high %v864, %v879
    %v899 = vunpack.c.l.s4 1934713408
    %v900 = vunpack.c.0.s8 %v899
    %v901 = vlaneseq
    %v902 = vshrl.u32 %v901, 7
    %v903 = vsub.s32 %v900, %v902
    %v904 = vrot.slane %v896, %v903
    %v906 = vunpack.c.l.s4 1934713408
    %v907 = vunpack.c.0.s8 %v906
    %v908 = vlaneseq
    %v909 = vshrl.u32 %v908, 7
    %v910 = vsub.s32 %v907, %v909
    %v911 = vrot.slane %v897, %v910
    %v912 = vcombine.high %v888, 0.0
    %v913 = vcombine.high %v895, 0.0
    %v914 = vcombine.high %v904, 0.0
    %v915 = vcombine.high %v911, 0.0
    %v916 = vcombine.high %v479, 0.0
    %v918 = vunpack.c.l.s4 1983009808
    %v919 = vunpack.c.0.s8 %v918
    %v920 = vlaneseq
    %v921 = vshrl.u32 %v920, 7
    %v922 = vsub.s32 %v919, %v921
    %v923 = vrot.slane %v479, %v922
    %v925 = vunpack.c.l.s4 1983009808
    %v926 = vunpack.c.0.s8 %v925
    %v927 = vlaneseq
    %v928 = vshrl.u32 %v927, 7
    %v929 = vsub.s32 %v926, %v928
    %v930 = vrot.slane %v916, %v929
    %v931 = vcombine.high %v543, 0.0
    %v933 = vunpack.c.l.s4 1983009808
    %v934 = vunpack.c.0.s8 %v933
    %v935 = vlaneseq
    %v936 = vshrl.u32 %v935, 7
    %v937 = vsub.s32 %v934, %v936
    %v938 = vrot.slane %v543, %v937
    %v940 = vunpack.c.l.s4 1983009808
    %v941 = vunpack.c.0.s8 %v940
    %v942 = vlaneseq
    %v943 = vshrl.u32 %v942, 7
    %v944 = vsub.s32 %v941, %v943
    %v945 = vrot.slane %v931, %v944
    %v946 = vcombine.low %v923, %v938
    %v947 = vcombine.high %v923, %v938
    %v949 = vunpack.c.l.s4 1934713408
    %v950 = vunpack.c.0.s8 %v949
    %v951 = vlaneseq
    %v952 = vshrl.u32 %v951, 7
    %v953 = vsub.s32 %v950, %v952
    %v954 = vrot.slane %v946, %v953
    %v956 = vunpack.c.l.s4 1934713408
    %v957 = vunpack.c.0.s8 %v956
    %v958 = vlaneseq
    %v959 = vshrl.u32 %v958, 7
    %v960 = vsub.s32 %v957, %v959
    %v961 = vrot.slane %v947, %v960
    %v962 = vcombine.low %v930, %v945
    %v963 = vcombine.high %v930, %v945
    %v965 = vunpack.c.l.s4 1934713408
    %v966 = vunpack.c.0.s8 %v965
    %v967 = vlaneseq
    %v968 = vshrl.u32 %v967, 7
    %v969 = vsub.s32 %v966, %v968
    %v970 = vrot.slane %v962, %v969
    %v972 = vunpack.c.l.s4 1934713408
    %v973 = vunpack.c.0.s8 %v972
    %v974 = vlaneseq
    %v975 = vshrl.u32 %v974, 7
    %v976 = vsub.s32 %v973, %v975
    %v977 = vrot.slane %v963, %v976
    %v978 = vcombine.high %v954, 0.0
    %v979 = vcombine.high %v961, 0.0
    %v980 = vcombine.high %v970, 0.0
    %v981 = vcombine.high %v977, 0.0
    %v982 = vcombine.high %v480, 0.0
    %v984 = vunpack.c.l.s4 1983009808
    %v985 = vunpack.c.0.s8 %v984
    %v986 = vlaneseq
    %v987 = vshrl.u32 %v986, 7
    %v988 = vsub.s32 %v985, %v987
    %v989 = vrot.slane %v480, %v988
    %v991 = vunpack.c.l.s4 1983009808
    %v992 = vunpack.c.0.s8 %v991
    %v993 = vlaneseq
    %v994 = vshrl.u32 %v993, 7
    %v995 = vsub.s32 %v992, %v994
    %v996 = vrot.slane %v982, %v995
    %v997 = vcombine.high %v544, 0.0
    %v999 = vunpack.c.l.s4 1983009808
    %v1000 = vunpack.c.0.s8 %v999
    %v1001 = vlaneseq
    %v1002 = vshrl.u32 %v1001, 7
    %v1003 = vsub.s32 %v1000, %v1002
    %v1004 = vrot.slane %v544, %v1003
    %v1006 = vunpack.c.l.s4 1983009808
    %v1007 = vunpack.c.0.s8 %v1006
    %v1008 = vlaneseq
    %v1009 = vshrl.u32 %v1008, 7
    %v1010 = vsub.s32 %v1007, %v1009
    %v1011 = vrot.slane %v997, %v1010
    %v1012 = vcombine.low %v989, %v1004
    %v1013 = vcombine.high %v989, %v1004
    %v1015 = vunpack.c.l.s4 1934713408
    %v1016 = vunpack.c.0.s8 %v1015
    %v1017 = vlaneseq
    %v1018 = vshrl.u32 %v1017, 7
    %v1019 = vsub.s32 %v1016, %v1018
    %v1020 = vrot.slane %v1012, %v1019
    %v1022 = vunpack.c.l.s4 1934713408
    %v1023 = vunpack.c.0.s8 %v1022
    %v1024 = vlaneseq
    %v1025 = vshrl.u32 %v1024, 7
    %v1026 = vsub.s32 %v1023, %v1025
    %v1027 = vrot.slane %v1013, %v1026
    %v1028 = vcombine.low %v996, %v1011
    %v1029 = vcombine.high %v996, %v1011
    %v1031 = vunpack.c.l.s4 1934713408
    %v1032 = vunpack.c.0.s8 %v1031
    %v1033 = vlaneseq
    %v1034 = vshrl.u32 %v1033, 7
    %v1035 = vsub.s32 %v1032, %v1034
    %v1036 = vrot.slane %v1028, %v1035
    %v1038 = vunpack.c.l.s4 1934713408
    %v1039 = vunpack.c.0.s8 %v1038
    %v1040 = vlaneseq
    %v1041 = vshrl.u32 %v1040, 7
    %v1042 = vsub.s32 %v1039, %v1041
    %v1043 = vrot.slane %v1029, %v1042
    %v1044 = vcombine.high %v1020, 0.0
    %v1045 = vcombine.high %v1027, 0.0
    %v1046 = vcombine.high %v1036, 0.0
    %v1047 = vcombine.high %v1043, 0.0
    %v1048 = vcombine.high %v481, 0.0
    %v1050 = vunpack.c.l.s4 1983009808
    %v1051 = vunpack.c.0.s8 %v1050
    %v1052 = vlaneseq
    %v1053 = vshrl.u32 %v1052, 7
    %v1054 = vsub.s32 %v1051, %v1053
    %v1055 = vrot.slane %v481, %v1054
    %v1057 = vunpack.c.l.s4 1983009808
    %v1058 = vunpack.c.0.s8 %v1057
    %v1059 = vlaneseq
    %v1060 = vshrl.u32 %v1059, 7
    %v1061 = vsub.s32 %v1058, %v1060
    %v1062 = vrot.slane %v1048, %v1061
    %v1063 = vcombine.high %v545, 0.0
    %v1065 = vunpack.c.l.s4 1983009808
    %v1066 = vunpack.c.0.s8 %v1065
    %v1067 = vlaneseq
    %v1068 = vshrl.u32 %v1067, 7
    %v1069 = vsub.s32 %v1066, %v1068
    %v1070 = vrot.slane %v545, %v1069
    %v1072 = vunpack.c.l.s4 1983009808
    %v1073 = vunpack.c.0.s8 %v1072
    %v1074 = vlaneseq
    %v1075 = vshrl.u32 %v1074, 7
    %v1076 = vsub.s32 %v1073, %v1075
    %v1077 = vrot.slane %v1063, %v1076
    %v1078 = vcombine.low %v1055, %v1070
    %v1079 = vcombine.high %v1055, %v1070
    %v1081 = vunpack.c.l.s4 1934713408
    %v1082 = vunpack.c.0.s8 %v1081
    %v1083 = vlaneseq
    %v1084 = vshrl.u32 %v1083, 7
    %v1085 = vsub.s32 %v1082, %v1084
    %v1086 = vrot.slane %v1078, %v1085
    %v1088 = vunpack.c.l.s4 1934713408
    %v1089 = vunpack.c.0.s8 %v1088
    %v1090 = vlaneseq
    %v1091 = vshrl.u32 %v1090, 7
    %v1092 = vsub.s32 %v1089, %v1091
    %v1093 = vrot.slane %v1079, %v1092
    %v1094 = vcombine.low %v1062, %v1077
    %v1095 = vcombine.high %v1062, %v1077
    %v1097 = vunpack.c.l.s4 1934713408
    %v1098 = vunpack.c.0.s8 %v1097
    %v1099 = vlaneseq
    %v1100 = vshrl.u32 %v1099, 7
    %v1101 = vsub.s32 %v1098, %v1100
    %v1102 = vrot.slane %v1094, %v1101
    %v1104 = vunpack.c.l.s4 1934713408
    %v1105 = vunpack.c.0.s8 %v1104
    %v1106 = vlaneseq
    %v1107 = vshrl.u32 %v1106, 7
    %v1108 = vsub.s32 %v1105, %v1107
    %v1109 = vrot.slane %v1095, %v1108
    %v1110 = vcombine.high %v1086, 0.0
    %v1111 = vcombine.high %v1093, 0.0
    %v1112 = vcombine.high %v1102, 0.0
    %v1113 = vcombine.high %v1109, 0.0
    %v1114 = vcombine.high %v482, 0.0
    %v1116 = vunpack.c.l.s4 1983009808
    %v1117 = vunpack.c.0.s8 %v1116
    %v1118 = vlaneseq
    %v1119 = vshrl.u32 %v1118, 7
    %v1120 = vsub.s32 %v1117, %v1119
    %v1121 = vrot.slane %v482, %v1120
    %v1123 = vunpack.c.l.s4 1983009808
    %v1124 = vunpack.c.0.s8 %v1123
    %v1125 = vlaneseq
    %v1126 = vshrl.u32 %v1125, 7
    %v1127 = vsub.s32 %v1124, %v1126
    %v1128 = vrot.slane %v1114, %v1127
    %v1129 = vcombine.high %v546, 0.0
    %v1131 = vunpack.c.l.s4 1983009808
    %v1132 = vunpack.c.0.s8 %v1131
    %v1133 = vlaneseq
    %v1134 = vshrl.u32 %v1133, 7
    %v1135 = vsub.s32 %v1132, %v1134
    %v1136 = vrot.slane %v546, %v1135
    %v1138 = vunpack.c.l.s4 1983009808
    %v1139 = vunpack.c.0.s8 %v1138
    %v1140 = vlaneseq
    %v1141 = vshrl.u32 %v1140, 7
    %v1142 = vsub.s32 %v1139, %v1141
    %v1143 = vrot.slane %v1129, %v1142
    %v1144 = vcombine.low %v1121, %v1136
    %v1145 = vcombine.high %v1121, %v1136
    %v1147 = vunpack.c.l.s4 1934713408
    %v1148 = vunpack.c.0.s8 %v1147
    %v1149 = vlaneseq
    %v1150 = vshrl.u32 %v1149, 7
    %v1151 = vsub.s32 %v1148, %v1150
    %v1152 = vrot.slane %v1144, %v1151
    %v1154 = vunpack.c.l.s4 1934713408
    %v1155 = vunpack.c.0.s8 %v1154
    %v1156 = vlaneseq
    %v1157 = vshrl.u32 %v1156, 7
    %v1158 = vsub.s32 %v1155, %v1157
    %v1159 = vrot.slane %v1145, %v1158
    %v1160 = vcombine.low %v1128, %v1143
    %v1161 = vcombine.high %v1128, %v1143
    %v1163 = vunpack.c.l.s4 1934713408
    %v1164 = vunpack.c.0.s8 %v1163
    %v1165 = vlaneseq
    %v1166 = vshrl.u32 %v1165, 7
    %v1167 = vsub.s32 %v1164, %v1166
    %v1168 = vrot.slane %v1160, %v1167
    %v1170 = vunpack.c.l.s4 1934713408
    %v1171 = vunpack.c.0.s8 %v1170
    %v1172 = vlaneseq
    %v1173 = vshrl.u32 %v1172, 7
    %v1174 = vsub.s32 %v1171, %v1173
    %v1175 = vrot.slane %v1161, %v1174
    %v1176 = vcombine.high %v1152, 0.0
    %v1177 = vcombine.high %v1159, 0.0
    %v1178 = vcombine.high %v1168, 0.0
    %v1179 = vcombine.high %v1175, 0.0
    %v1180 = vcombine.high %v483, 0.0
    %v1182 = vunpack.c.l.s4 1983009808
    %v1183 = vunpack.c.0.s8 %v1182
    %v1184 = vlaneseq
    %v1185 = vshrl.u32 %v1184, 7
    %v1186 = vsub.s32 %v1183, %v1185
    %v1187 = vrot.slane %v483, %v1186
    %v1189 = vunpack.c.l.s4 1983009808
    %v1190 = vunpack.c.0.s8 %v1189
    %v1191 = vlaneseq
    %v1192 = vshrl.u32 %v1191, 7
    %v1193 = vsub.s32 %v1190, %v1192
    %v1194 = vrot.slane %v1180, %v1193
    %v1195 = vcombine.high %v547, 0.0
    %v1197 = vunpack.c.l.s4 1983009808
    %v1198 = vunpack.c.0.s8 %v1197
    %v1199 = vlaneseq
    %v1200 = vshrl.u32 %v1199, 7
    %v1201 = vsub.s32 %v1198, %v1200
    %v1202 = vrot.slane %v547, %v1201
    %v1204 = vunpack.c.l.s4 1983009808
    %v1205 = vunpack.c.0.s8 %v1204
    %v1206 = vlaneseq
    %v1207 = vshrl.u32 %v1206, 7
    %v1208 = vsub.s32 %v1205, %v1207
    %v1209 = vrot.slane %v1195, %v1208
    %v1210 = vcombine.low %v1187, %v1202
    %v1211 = vcombine.high %v1187, %v1202
    %v1213 = vunpack.c.l.s4 1934713408
    %v1214 = vunpack.c.0.s8 %v1213
    %v1215 = vlaneseq
    %v1216 = vshrl.u32 %v1215, 7
    %v1217 = vsub.s32 %v1214, %v1216
    %v1218 = vrot.slane %v1210, %v1217
    %v1220 = vunpack.c.l.s4 1934713408
    %v1221 = vunpack.c.0.s8 %v1220
    %v1222 = vlaneseq
    %v1223 = vshrl.u32 %v1222, 7
    %v1224 = vsub.s32 %v1221, %v1223
    %v1225 = vrot.slane %v1211, %v1224
    %v1226 = vcombine.low %v1194, %v1209
    %v1227 = vcombine.high %v1194, %v1209
    %v1229 = vunpack.c.l.s4 1934713408
    %v1230 = vunpack.c.0.s8 %v1229
    %v1231 = vlaneseq
    %v1232 = vshrl.u32 %v1231, 7
    %v1233 = vsub.s32 %v1230, %v1232
    %v1234 = vrot.slane %v1226, %v1233
    %v1236 = vunpack.c.l.s4 1934713408
    %v1237 = vunpack.c.0.s8 %v1236
    %v1238 = vlaneseq
    %v1239 = vshrl.u32 %v1238, 7
    %v1240 = vsub.s32 %v1237, %v1239
    %v1241 = vrot.slane %v1227, %v1240
    %v1242 = vcombine.high %v1218, 0.0
    %v1243 = vcombine.high %v1225, 0.0
    %v1244 = vcombine.high %v1234, 0.0
    %v1245 = vcombine.high %v1241, 0.0
    %v1246 = vcombine.high %v484, 0.0
    %v1248 = vunpack.c.l.s4 1983009808
    %v1249 = vunpack.c.0.s8 %v1248
    %v1250 = vlaneseq
    %v1251 = vshrl.u32 %v1250, 7
    %v1252 = vsub.s32 %v1249, %v1251
    %v1253 = vrot.slane %v484, %v1252
    %v1255 = vunpack.c.l.s4 1983009808
    %v1256 = vunpack.c.0.s8 %v1255
    %v1257 = vlaneseq
    %v1258 = vshrl.u32 %v1257, 7
    %v1259 = vsub.s32 %v1256, %v1258
    %v1260 = vrot.slane %v1246, %v1259
    %v1261 = vcombine.high %v548, 0.0
    %v1263 = vunpack.c.l.s4 1983009808
    %v1264 = vunpack.c.0.s8 %v1263
    %v1265 = vlaneseq
    %v1266 = vshrl.u32 %v1265, 7
    %v1267 = vsub.s32 %v1264, %v1266
    %v1268 = vrot.slane %v548, %v1267
    %v1270 = vunpack.c.l.s4 1983009808
    %v1271 = vunpack.c.0.s8 %v1270
    %v1272 = vlaneseq
    %v1273 = vshrl.u32 %v1272, 7
    %v1274 = vsub.s32 %v1271, %v1273
    %v1275 = vrot.slane %v1261, %v1274
    %v1276 = vcombine.low %v1253, %v1268
    %v1277 = vcombine.high %v1253, %v1268
    %v1279 = vunpack.c.l.s4 1934713408
    %v1280 = vunpack.c.0.s8 %v1279
    %v1281 = vlaneseq
    %v1282 = vshrl.u32 %v1281, 7
    %v1283 = vsub.s32 %v1280, %v1282
    %v1284 = vrot.slane %v1276, %v1283
    %v1286 = vunpack.c.l.s4 1934713408
    %v1287 = vunpack.c.0.s8 %v1286
    %v1288 = vlaneseq
    %v1289 = vshrl.u32 %v1288, 7
    %v1290 = vsub.s32 %v1287, %v1289
    %v1291 = vrot.slane %v1277, %v1290
    %v1292 = vcombine.low %v1260, %v1275
    %v1293 = vcombine.high %v1260, %v1275
    %v1295 = vunpack.c.l.s4 1934713408
    %v1296 = vunpack.c.0.s8 %v1295
    %v1297 = vlaneseq
    %v1298 = vshrl.u32 %v1297, 7
    %v1299 = vsub.s32 %v1296, %v1298
    %v1300 = vrot.slane %v1292, %v1299
    %v1302 = vunpack.c.l.s4 1934713408
    %v1303 = vunpack.c.0.s8 %v1302
    %v1304 = vlaneseq
    %v1305 = vshrl.u32 %v1304, 7
    %v1306 = vsub.s32 %v1303, %v1305
    %v1307 = vrot.slane %v1293, %v1306
    %v1308 = vcombine.high %v1284, 0.0
    %v1309 = vcombine.high %v1291, 0.0
    %v1310 = vcombine.high %v1300, 0.0
    %v1311 = vcombine.high %v1307, 0.0
    %v1312 = vcombine.high %v485, 0.0
    %v1314 = vunpack.c.l.s4 1983009808
    %v1315 = vunpack.c.0.s8 %v1314
    %v1316 = vlaneseq
    %v1317 = vshrl.u32 %v1316, 7
    %v1318 = vsub.s32 %v1315, %v1317
    %v1319 = vrot.slane %v485, %v1318
    %v1321 = vunpack.c.l.s4 1983009808
    %v1322 = vunpack.c.0.s8 %v1321
    %v1323 = vlaneseq
    %v1324 = vshrl.u32 %v1323, 7
    %v1325 = vsub.s32 %v1322, %v1324
    %v1326 = vrot.slane %v1312, %v1325
    %v1327 = vcombine.high %v549, 0.0
    %v1329 = vunpack.c.l.s4 1983009808
    %v1330 = vunpack.c.0.s8 %v1329
    %v1331 = vlaneseq
    %v1332 = vshrl.u32 %v1331, 7
    %v1333 = vsub.s32 %v1330, %v1332
    %v1334 = vrot.slane %v549, %v1333
    %v1336 = vunpack.c.l.s4 1983009808
    %v1337 = vunpack.c.0.s8 %v1336
    %v1338 = vlaneseq
    %v1339 = vshrl.u32 %v1338, 7
    %v1340 = vsub.s32 %v1337, %v1339
    %v1341 = vrot.slane %v1327, %v1340
    %v1342 = vcombine.low %v1319, %v1334
    %v1343 = vcombine.high %v1319, %v1334
    %v1345 = vunpack.c.l.s4 1934713408
    %v1346 = vunpack.c.0.s8 %v1345
    %v1347 = vlaneseq
    %v1348 = vshrl.u32 %v1347, 7
    %v1349 = vsub.s32 %v1346, %v1348
    %v1350 = vrot.slane %v1342, %v1349
    %v1352 = vunpack.c.l.s4 1934713408
    %v1353 = vunpack.c.0.s8 %v1352
    %v1354 = vlaneseq
    %v1355 = vshrl.u32 %v1354, 7
    %v1356 = vsub.s32 %v1353, %v1355
    %v1357 = vrot.slane %v1343, %v1356
    %v1358 = vcombine.low %v1326, %v1341
    %v1359 = vcombine.high %v1326, %v1341
    %v1361 = vunpack.c.l.s4 1934713408
    %v1362 = vunpack.c.0.s8 %v1361
    %v1363 = vlaneseq
    %v1364 = vshrl.u32 %v1363, 7
    %v1365 = vsub.s32 %v1362, %v1364
    %v1366 = vrot.slane %v1358, %v1365
    %v1368 = vunpack.c.l.s4 1934713408
    %v1369 = vunpack.c.0.s8 %v1368
    %v1370 = vlaneseq
    %v1371 = vshrl.u32 %v1370, 7
    %v1372 = vsub.s32 %v1369, %v1371
    %v1373 = vrot.slane %v1359, %v1372
    %v1374 = vcombine.high %v1350, 0.0
    %v1375 = vcombine.high %v1357, 0.0
    %v1376 = vcombine.high %v1366, 0.0
    %v1377 = vcombine.high %v1373, 0.0
    %v1378 = vcombine.high %v486, 0.0
    %v1380 = vunpack.c.l.s4 1983009808
    %v1381 = vunpack.c.0.s8 %v1380
    %v1382 = vlaneseq
    %v1383 = vshrl.u32 %v1382, 7
    %v1384 = vsub.s32 %v1381, %v1383
    %v1385 = vrot.slane %v486, %v1384
    %v1387 = vunpack.c.l.s4 1983009808
    %v1388 = vunpack.c.0.s8 %v1387
    %v1389 = vlaneseq
    %v1390 = vshrl.u32 %v1389, 7
    %v1391 = vsub.s32 %v1388, %v1390
    %v1392 = vrot.slane %v1378, %v1391
    %v1393 = vcombine.high %v550, 0.0
    %v1395 = vunpack.c.l.s4 1983009808
    %v1396 = vunpack.c.0.s8 %v1395
    %v1397 = vlaneseq
    %v1398 = vshrl.u32 %v1397, 7
    %v1399 = vsub.s32 %v1396, %v1398
    %v1400 = vrot.slane %v550, %v1399
    %v1402 = vunpack.c.l.s4 1983009808
    %v1403 = vunpack.c.0.s8 %v1402
    %v1404 = vlaneseq
    %v1405 = vshrl.u32 %v1404, 7
    %v1406 = vsub.s32 %v1403, %v1405
    %v1407 = vrot.slane %v1393, %v1406
    %v1408 = vcombine.low %v1385, %v1400
    %v1409 = vcombine.high %v1385, %v1400
    %v1411 = vunpack.c.l.s4 1934713408
    %v1412 = vunpack.c.0.s8 %v1411
    %v1413 = vlaneseq
    %v1414 = vshrl.u32 %v1413, 7
    %v1415 = vsub.s32 %v1412, %v1414
    %v1416 = vrot.slane %v1408, %v1415
    %v1418 = vunpack.c.l.s4 1934713408
    %v1419 = vunpack.c.0.s8 %v1418
    %v1420 = vlaneseq
    %v1421 = vshrl.u32 %v1420, 7
    %v1422 = vsub.s32 %v1419, %v1421
    %v1423 = vrot.slane %v1409, %v1422
    %v1424 = vcombine.low %v1392, %v1407
    %v1425 = vcombine.high %v1392, %v1407
    %v1427 = vunpack.c.l.s4 1934713408
    %v1428 = vunpack.c.0.s8 %v1427
    %v1429 = vlaneseq
    %v1430 = vshrl.u32 %v1429, 7
    %v1431 = vsub.s32 %v1428, %v1430
    %v1432 = vrot.slane %v1424, %v1431
    %v1434 = vunpack.c.l.s4 1934713408
    %v1435 = vunpack.c.0.s8 %v1434
    %v1436 = vlaneseq
    %v1437 = vshrl.u32 %v1436, 7
    %v1438 = vsub.s32 %v1435, %v1437
    %v1439 = vrot.slane %v1425, %v1438
    %v1440 = vcombine.high %v1416, 0.0
    %v1441 = vcombine.high %v1423, 0.0
    %v1442 = vcombine.high %v1432, 0.0
    %v1443 = vcombine.high %v1439, 0.0
    %v1444 = vcombine.high %v487, 0.0
    %v1446 = vunpack.c.l.s4 1983009808
    %v1447 = vunpack.c.0.s8 %v1446
    %v1448 = vlaneseq
    %v1449 = vshrl.u32 %v1448, 7
    %v1450 = vsub.s32 %v1447, %v1449
    %v1451 = vrot.slane %v487, %v1450
    %v1453 = vunpack.c.l.s4 1983009808
    %v1454 = vunpack.c.0.s8 %v1453
    %v1455 = vlaneseq
    %v1456 = vshrl.u32 %v1455, 7
    %v1457 = vsub.s32 %v1454, %v1456
    %v1458 = vrot.slane %v1444, %v1457
    %v1459 = vcombine.high %v551, 0.0
    %v1461 = vunpack.c.l.s4 1983009808
    %v1462 = vunpack.c.0.s8 %v1461
    %v1463 = vlaneseq
    %v1464 = vshrl.u32 %v1463, 7
    %v1465 = vsub.s32 %v1462, %v1464
    %v1466 = vrot.slane %v551, %v1465
    %v1468 = vunpack.c.l.s4 1983009808
    %v1469 = vunpack.c.0.s8 %v1468
    %v1470 = vlaneseq
    %v1471 = vshrl.u32 %v1470, 7
    %v1472 = vsub.s32 %v1469, %v1471
    %v1473 = vrot.slane %v1459, %v1472
    %v1474 = vcombine.low %v1451, %v1466
    %v1475 = vcombine.high %v1451, %v1466
    %v1477 = vunpack.c.l.s4 1934713408
    %v1478 = vunpack.c.0.s8 %v1477
    %v1479 = vlaneseq
    %v1480 = vshrl.u32 %v1479, 7
    %v1481 = vsub.s32 %v1478, %v1480
    %v1482 = vrot.slane %v1474, %v1481
    %v1484 = vunpack.c.l.s4 1934713408
    %v1485 = vunpack.c.0.s8 %v1484
    %v1486 = vlaneseq
    %v1487 = vshrl.u32 %v1486, 7
    %v1488 = vsub.s32 %v1485, %v1487
    %v1489 = vrot.slane %v1475, %v1488
    %v1490 = vcombine.low %v1458, %v1473
    %v1491 = vcombine.high %v1458, %v1473
    %v1493 = vunpack.c.l.s4 1934713408
    %v1494 = vunpack.c.0.s8 %v1493
    %v1495 = vlaneseq
    %v1496 = vshrl.u32 %v1495, 7
    %v1497 = vsub.s32 %v1494, %v1496
    %v1498 = vrot.slane %v1490, %v1497
    %v1500 = vunpack.c.l.s4 1934713408
    %v1501 = vunpack.c.0.s8 %v1500
    %v1502 = vlaneseq
    %v1503 = vshrl.u32 %v1502, 7
    %v1504 = vsub.s32 %v1501, %v1503
    %v1505 = vrot.slane %v1491, %v1504
    %v1506 = vcombine.high %v1482, 0.0
    %v1507 = vcombine.high %v1489, 0.0
    %v1508 = vcombine.high %v1498, 0.0
    %v1509 = vcombine.high %v1505, 0.0
    %v1510 = vcombine.high %v488, 0.0
    %v1512 = vunpack.c.l.s4 1983009808
    %v1513 = vunpack.c.0.s8 %v1512
    %v1514 = vlaneseq
    %v1515 = vshrl.u32 %v1514, 7
    %v1516 = vsub.s32 %v1513, %v1515
    %v1517 = vrot.slane %v488, %v1516
    %v1519 = vunpack.c.l.s4 1983009808
    %v1520 = vunpack.c.0.s8 %v1519
    %v1521 = vlaneseq
    %v1522 = vshrl.u32 %v1521, 7
    %v1523 = vsub.s32 %v1520, %v1522
    %v1524 = vrot.slane %v1510, %v1523
    %v1525 = vcombine.high %v552, 0.0
    %v1527 = vunpack.c.l.s4 1983009808
    %v1528 = vunpack.c.0.s8 %v1527
    %v1529 = vlaneseq
    %v1530 = vshrl.u32 %v1529, 7
    %v1531 = vsub.s32 %v1528, %v1530
    %v1532 = vrot.slane %v552, %v1531
    %v1534 = vunpack.c.l.s4 1983009808
    %v1535 = vunpack.c.0.s8 %v1534
    %v1536 = vlaneseq
    %v1537 = vshrl.u32 %v1536, 7
    %v1538 = vsub.s32 %v1535, %v1537
    %v1539 = vrot.slane %v1525, %v1538
    %v1540 = vcombine.low %v1517, %v1532
    %v1541 = vcombine.high %v1517, %v1532
    %v1543 = vunpack.c.l.s4 1934713408
    %v1544 = vunpack.c.0.s8 %v1543
    %v1545 = vlaneseq
    %v1546 = vshrl.u32 %v1545, 7
    %v1547 = vsub.s32 %v1544, %v1546
    %v1548 = vrot.slane %v1540, %v1547
    %v1550 = vunpack.c.l.s4 1934713408
    %v1551 = vunpack.c.0.s8 %v1550
    %v1552 = vlaneseq
    %v1553 = vshrl.u32 %v1552, 7
    %v1554 = vsub.s32 %v1551, %v1553
    %v1555 = vrot.slane %v1541, %v1554
    %v1556 = vcombine.low %v1524, %v1539
    %v1557 = vcombine.high %v1524, %v1539
    %v1559 = vunpack.c.l.s4 1934713408
    %v1560 = vunpack.c.0.s8 %v1559
    %v1561 = vlaneseq
    %v1562 = vshrl.u32 %v1561, 7
    %v1563 = vsub.s32 %v1560, %v1562
    %v1564 = vrot.slane %v1556, %v1563
    %v1566 = vunpack.c.l.s4 1934713408
    %v1567 = vunpack.c.0.s8 %v1566
    %v1568 = vlaneseq
    %v1569 = vshrl.u32 %v1568, 7
    %v1570 = vsub.s32 %v1567, %v1569
    %v1571 = vrot.slane %v1557, %v1570
    %v1572 = vcombine.high %v1548, 0.0
    %v1573 = vcombine.high %v1555, 0.0
    %v1574 = vcombine.high %v1564, 0.0
    %v1575 = vcombine.high %v1571, 0.0
    %v1576 = vcombine.high %v489, 0.0
    %v1578 = vunpack.c.l.s4 1983009808
    %v1579 = vunpack.c.0.s8 %v1578
    %v1580 = vlaneseq
    %v1581 = vshrl.u32 %v1580, 7
    %v1582 = vsub.s32 %v1579, %v1581
    %v1583 = vrot.slane %v489, %v1582
    %v1585 = vunpack.c.l.s4 1983009808
    %v1586 = vunpack.c.0.s8 %v1585
    %v1587 = vlaneseq
    %v1588 = vshrl.u32 %v1587, 7
    %v1589 = vsub.s32 %v1586, %v1588
    %v1590 = vrot.slane %v1576, %v1589
    %v1591 = vcombine.high %v553, 0.0
    %v1593 = vunpack.c.l.s4 1983009808
    %v1594 = vunpack.c.0.s8 %v1593
    %v1595 = vlaneseq
    %v1596 = vshrl.u32 %v1595, 7
    %v1597 = vsub.s32 %v1594, %v1596
    %v1598 = vrot.slane %v553, %v1597
    %v1600 = vunpack.c.l.s4 1983009808
    %v1601 = vunpack.c.0.s8 %v1600
    %v1602 = vlaneseq
    %v1603 = vshrl.u32 %v1602, 7
    %v1604 = vsub.s32 %v1601, %v1603
    %v1605 = vrot.slane %v1591, %v1604
    %v1606 = vcombine.low %v1583, %v1598
    %v1607 = vcombine.high %v1583, %v1598
    %v1609 = vunpack.c.l.s4 1934713408
    %v1610 = vunpack.c.0.s8 %v1609
    %v1611 = vlaneseq
    %v1612 = vshrl.u32 %v1611, 7
    %v1613 = vsub.s32 %v1610, %v1612
    %v1614 = vrot.slane %v1606, %v1613
    %v1616 = vunpack.c.l.s4 1934713408
    %v1617 = vunpack.c.0.s8 %v1616
    %v1618 = vlaneseq
    %v1619 = vshrl.u32 %v1618, 7
    %v1620 = vsub.s32 %v1617, %v1619
    %v1621 = vrot.slane %v1607, %v1620
    %v1622 = vcombine.low %v1590, %v1605
    %v1623 = vcombine.high %v1590, %v1605
    %v1625 = vunpack.c.l.s4 1934713408
    %v1626 = vunpack.c.0.s8 %v1625
    %v1627 = vlaneseq
    %v1628 = vshrl.u32 %v1627, 7
    %v1629 = vsub.s32 %v1626, %v1628
    %v1630 = vrot.slane %v1622, %v1629
    %v1632 = vunpack.c.l.s4 1934713408
    %v1633 = vunpack.c.0.s8 %v1632
    %v1634 = vlaneseq
    %v1635 = vshrl.u32 %v1634, 7
    %v1636 = vsub.s32 %v1633, %v1635
    %v1637 = vrot.slane %v1623, %v1636
    %v1638 = vcombine.high %v1614, 0.0
    %v1639 = vcombine.high %v1621, 0.0
    %v1640 = vcombine.high %v1630, 0.0
    %v1641 = vcombine.high %v1637, 0.0
    %v1642 = vcombine.high %v506, 0.0
    %v1644 = vunpack.c.l.s4 1983009808
    %v1645 = vunpack.c.0.s8 %v1644
    %v1646 = vlaneseq
    %v1647 = vshrl.u32 %v1646, 7
    %v1648 = vsub.s32 %v1645, %v1647
    %v1649 = vrot.slane %v506, %v1648
    %v1651 = vunpack.c.l.s4 1983009808
    %v1652 = vunpack.c.0.s8 %v1651
    %v1653 = vlaneseq
    %v1654 = vshrl.u32 %v1653, 7
    %v1655 = vsub.s32 %v1652, %v1654
    %v1656 = vrot.slane %v1642, %v1655
    %v1657 = vcombine.high %v570, 0.0
    %v1659 = vunpack.c.l.s4 1983009808
    %v1660 = vunpack.c.0.s8 %v1659
    %v1661 = vlaneseq
    %v1662 = vshrl.u32 %v1661, 7
    %v1663 = vsub.s32 %v1660, %v1662
    %v1664 = vrot.slane %v570, %v1663
    %v1666 = vunpack.c.l.s4 1983009808
    %v1667 = vunpack.c.0.s8 %v1666
    %v1668 = vlaneseq
    %v1669 = vshrl.u32 %v1668, 7
    %v1670 = vsub.s32 %v1667, %v1669
    %v1671 = vrot.slane %v1657, %v1670
    %v1672 = vcombine.low %v1649, %v1664
    %v1673 = vcombine.high %v1649, %v1664
    %v1675 = vunpack.c.l.s4 1934713408
    %v1676 = vunpack.c.0.s8 %v1675
    %v1677 = vlaneseq
    %v1678 = vshrl.u32 %v1677, 7
    %v1679 = vsub.s32 %v1676, %v1678
    %v1680 = vrot.slane %v1672, %v1679
    %v1682 = vunpack.c.l.s4 1934713408
    %v1683 = vunpack.c.0.s8 %v1682
    %v1684 = vlaneseq
    %v1685 = vshrl.u32 %v1684, 7
    %v1686 = vsub.s32 %v1683, %v1685
    %v1687 = vrot.slane %v1673, %v1686
    %v1688 = vcombine.low %v1656, %v1671
    %v1689 = vcombine.high %v1656, %v1671
    %v1691 = vunpack.c.l.s4 1934713408
    %v1692 = vunpack.c.0.s8 %v1691
    %v1693 = vlaneseq
    %v1694 = vshrl.u32 %v1693, 7
    %v1695 = vsub.s32 %v1692, %v1694
    %v1696 = vrot.slane %v1688, %v1695
    %v1698 = vunpack.c.l.s4 1934713408
    %v1699 = vunpack.c.0.s8 %v1698
    %v1700 = vlaneseq
    %v1701 = vshrl.u32 %v1700, 7
    %v1702 = vsub.s32 %v1699, %v1701
    %v1703 = vrot.slane %v1689, %v1702
    %v1704 = vcombine.high %v1680, 0.0
    %v1705 = vcombine.high %v1687, 0.0
    %v1706 = vcombine.high %v1696, 0.0
    %v1707 = vcombine.high %v1703, 0.0
    %v1708 = vcombine.high %v507, 0.0
    %v1710 = vunpack.c.l.s4 1983009808
    %v1711 = vunpack.c.0.s8 %v1710
    %v1712 = vlaneseq
    %v1713 = vshrl.u32 %v1712, 7
    %v1714 = vsub.s32 %v1711, %v1713
    %v1715 = vrot.slane %v507, %v1714
    %v1717 = vunpack.c.l.s4 1983009808
    %v1718 = vunpack.c.0.s8 %v1717
    %v1719 = vlaneseq
    %v1720 = vshrl.u32 %v1719, 7
    %v1721 = vsub.s32 %v1718, %v1720
    %v1722 = vrot.slane %v1708, %v1721
    %v1723 = vcombine.high %v571, 0.0
    %v1725 = vunpack.c.l.s4 1983009808
    %v1726 = vunpack.c.0.s8 %v1725
    %v1727 = vlaneseq
    %v1728 = vshrl.u32 %v1727, 7
    %v1729 = vsub.s32 %v1726, %v1728
    %v1730 = vrot.slane %v571, %v1729
    %v1732 = vunpack.c.l.s4 1983009808
    %v1733 = vunpack.c.0.s8 %v1732
    %v1734 = vlaneseq
    %v1735 = vshrl.u32 %v1734, 7
    %v1736 = vsub.s32 %v1733, %v1735
    %v1737 = vrot.slane %v1723, %v1736
    %v1738 = vcombine.low %v1715, %v1730
    %v1739 = vcombine.high %v1715, %v1730
    %v1741 = vunpack.c.l.s4 1934713408
    %v1742 = vunpack.c.0.s8 %v1741
    %v1743 = vlaneseq
    %v1744 = vshrl.u32 %v1743, 7
    %v1745 = vsub.s32 %v1742, %v1744
    %v1746 = vrot.slane %v1738, %v1745
    %v1748 = vunpack.c.l.s4 1934713408
    %v1749 = vunpack.c.0.s8 %v1748
    %v1750 = vlaneseq
    %v1751 = vshrl.u32 %v1750, 7
    %v1752 = vsub.s32 %v1749, %v1751
    %v1753 = vrot.slane %v1739, %v1752
    %v1754 = vcombine.low %v1722, %v1737
    %v1755 = vcombine.high %v1722, %v1737
    %v1757 = vunpack.c.l.s4 1934713408
    %v1758 = vunpack.c.0.s8 %v1757
    %v1759 = vlaneseq
    %v1760 = vshrl.u32 %v1759, 7
    %v1761 = vsub.s32 %v1758, %v1760
    %v1762 = vrot.slane %v1754, %v1761
    %v1764 = vunpack.c.l.s4 1934713408
    %v1765 = vunpack.c.0.s8 %v1764
    %v1766 = vlaneseq
    %v1767 = vshrl.u32 %v1766, 7
    %v1768 = vsub.s32 %v1765, %v1767
    %v1769 = vrot.slane %v1755, %v1768
    %v1770 = vcombine.high %v1746, 0.0
    %v1771 = vcombine.high %v1753, 0.0
    %v1772 = vcombine.high %v1762, 0.0
    %v1773 = vcombine.high %v1769, 0.0
    %v1774 = vcombine.high %v508, 0.0
    %v1776 = vunpack.c.l.s4 1983009808
    %v1777 = vunpack.c.0.s8 %v1776
    %v1778 = vlaneseq
    %v1779 = vshrl.u32 %v1778, 7
    %v1780 = vsub.s32 %v1777, %v1779
    %v1781 = vrot.slane %v508, %v1780
    %v1783 = vunpack.c.l.s4 1983009808
    %v1784 = vunpack.c.0.s8 %v1783
    %v1785 = vlaneseq
    %v1786 = vshrl.u32 %v1785, 7
    %v1787 = vsub.s32 %v1784, %v1786
    %v1788 = vrot.slane %v1774, %v1787
    %v1789 = vcombine.high %v572, 0.0
    %v1791 = vunpack.c.l.s4 1983009808
    %v1792 = vunpack.c.0.s8 %v1791
    %v1793 = vlaneseq
    %v1794 = vshrl.u32 %v1793, 7
    %v1795 = vsub.s32 %v1792, %v1794
    %v1796 = vrot.slane %v572, %v1795
    %v1798 = vunpack.c.l.s4 1983009808
    %v1799 = vunpack.c.0.s8 %v1798
    %v1800 = vlaneseq
    %v1801 = vshrl.u32 %v1800, 7
    %v1802 = vsub.s32 %v1799, %v1801
    %v1803 = vrot.slane %v1789, %v1802
    %v1804 = vcombine.low %v1781, %v1796
    %v1805 = vcombine.high %v1781, %v1796
    %v1807 = vunpack.c.l.s4 1934713408
    %v1808 = vunpack.c.0.s8 %v1807
    %v1809 = vlaneseq
    %v1810 = vshrl.u32 %v1809, 7
    %v1811 = vsub.s32 %v1808, %v1810
    %v1812 = vrot.slane %v1804, %v1811
    %v1814 = vunpack.c.l.s4 1934713408
    %v1815 = vunpack.c.0.s8 %v1814
    %v1816 = vlaneseq
    %v1817 = vshrl.u32 %v1816, 7
    %v1818 = vsub.s32 %v1815, %v1817
    %v1819 = vrot.slane %v1805, %v1818
    %v1820 = vcombine.low %v1788, %v1803
    %v1821 = vcombine.high %v1788, %v1803
    %v1823 = vunpack.c.l.s4 1934713408
    %v1824 = vunpack.c.0.s8 %v1823
    %v1825 = vlaneseq
    %v1826 = vshrl.u32 %v1825, 7
    %v1827 = vsub.s32 %v1824, %v1826
    %v1828 = vrot.slane %v1820, %v1827
    %v1830 = vunpack.c.l.s4 1934713408
    %v1831 = vunpack.c.0.s8 %v1830
    %v1832 = vlaneseq
    %v1833 = vshrl.u32 %v1832, 7
    %v1834 = vsub.s32 %v1831, %v1833
    %v1835 = vrot.slane %v1821, %v1834
    %v1836 = vcombine.high %v1812, 0.0
    %v1837 = vcombine.high %v1819, 0.0
    %v1838 = vcombine.high %v1828, 0.0
    %v1839 = vcombine.high %v1835, 0.0
    %v1840 = vcombine.high %v509, 0.0
    %v1842 = vunpack.c.l.s4 1983009808
    %v1843 = vunpack.c.0.s8 %v1842
    %v1844 = vlaneseq
    %v1845 = vshrl.u32 %v1844, 7
    %v1846 = vsub.s32 %v1843, %v1845
    %v1847 = vrot.slane %v509, %v1846
    %v1849 = vunpack.c.l.s4 1983009808
    %v1850 = vunpack.c.0.s8 %v1849
    %v1851 = vlaneseq
    %v1852 = vshrl.u32 %v1851, 7
    %v1853 = vsub.s32 %v1850, %v1852
    %v1854 = vrot.slane %v1840, %v1853
    %v1855 = vcombine.high %v573, 0.0
    %v1857 = vunpack.c.l.s4 1983009808
    %v1858 = vunpack.c.0.s8 %v1857
    %v1859 = vlaneseq
    %v1860 = vshrl.u32 %v1859, 7
    %v1861 = vsub.s32 %v1858, %v1860
    %v1862 = vrot.slane %v573, %v1861
    %v1864 = vunpack.c.l.s4 1983009808
    %v1865 = vunpack.c.0.s8 %v1864
    %v1866 = vlaneseq
    %v1867 = vshrl.u32 %v1866, 7
    %v1868 = vsub.s32 %v1865, %v1867
    %v1869 = vrot.slane %v1855, %v1868
    %v1870 = vcombine.low %v1847, %v1862
    %v1871 = vcombine.high %v1847, %v1862
    %v1873 = vunpack.c.l.s4 1934713408
    %v1874 = vunpack.c.0.s8 %v1873
    %v1875 = vlaneseq
    %v1876 = vshrl.u32 %v1875, 7
    %v1877 = vsub.s32 %v1874, %v1876
    %v1878 = vrot.slane %v1870, %v1877
    %v1880 = vunpack.c.l.s4 1934713408
    %v1881 = vunpack.c.0.s8 %v1880
    %v1882 = vlaneseq
    %v1883 = vshrl.u32 %v1882, 7
    %v1884 = vsub.s32 %v1881, %v1883
    %v1885 = vrot.slane %v1871, %v1884
    %v1886 = vcombine.low %v1854, %v1869
    %v1887 = vcombine.high %v1854, %v1869
    %v1889 = vunpack.c.l.s4 1934713408
    %v1890 = vunpack.c.0.s8 %v1889
    %v1891 = vlaneseq
    %v1892 = vshrl.u32 %v1891, 7
    %v1893 = vsub.s32 %v1890, %v1892
    %v1894 = vrot.slane %v1886, %v1893
    %v1896 = vunpack.c.l.s4 1934713408
    %v1897 = vunpack.c.0.s8 %v1896
    %v1898 = vlaneseq
    %v1899 = vshrl.u32 %v1898, 7
    %v1900 = vsub.s32 %v1897, %v1899
    %v1901 = vrot.slane %v1887, %v1900
    %v1902 = vcombine.high %v1878, 0.0
    %v1903 = vcombine.high %v1885, 0.0
    %v1904 = vcombine.high %v1894, 0.0
    %v1905 = vcombine.high %v1901, 0.0
    %v1906 = vcombine.high %v510, 0.0
    %v1908 = vunpack.c.l.s4 1983009808
    %v1909 = vunpack.c.0.s8 %v1908
    %v1910 = vlaneseq
    %v1911 = vshrl.u32 %v1910, 7
    %v1912 = vsub.s32 %v1909, %v1911
    %v1913 = vrot.slane %v510, %v1912
    %v1915 = vunpack.c.l.s4 1983009808
    %v1916 = vunpack.c.0.s8 %v1915
    %v1917 = vlaneseq
    %v1918 = vshrl.u32 %v1917, 7
    %v1919 = vsub.s32 %v1916, %v1918
    %v1920 = vrot.slane %v1906, %v1919
    %v1921 = vcombine.high %v574, 0.0
    %v1923 = vunpack.c.l.s4 1983009808
    %v1924 = vunpack.c.0.s8 %v1923
    %v1925 = vlaneseq
    %v1926 = vshrl.u32 %v1925, 7
    %v1927 = vsub.s32 %v1924, %v1926
    %v1928 = vrot.slane %v574, %v1927
    %v1930 = vunpack.c.l.s4 1983009808
    %v1931 = vunpack.c.0.s8 %v1930
    %v1932 = vlaneseq
    %v1933 = vshrl.u32 %v1932, 7
    %v1934 = vsub.s32 %v1931, %v1933
    %v1935 = vrot.slane %v1921, %v1934
    %v1936 = vcombine.low %v1913, %v1928
    %v1937 = vcombine.high %v1913, %v1928
    %v1939 = vunpack.c.l.s4 1934713408
    %v1940 = vunpack.c.0.s8 %v1939
    %v1941 = vlaneseq
    %v1942 = vshrl.u32 %v1941, 7
    %v1943 = vsub.s32 %v1940, %v1942
    %v1944 = vrot.slane %v1936, %v1943
    %v1946 = vunpack.c.l.s4 1934713408
    %v1947 = vunpack.c.0.s8 %v1946
    %v1948 = vlaneseq
    %v1949 = vshrl.u32 %v1948, 7
    %v1950 = vsub.s32 %v1947, %v1949
    %v1951 = vrot.slane %v1937, %v1950
    %v1952 = vcombine.low %v1920, %v1935
    %v1953 = vcombine.high %v1920, %v1935
    %v1955 = vunpack.c.l.s4 1934713408
    %v1956 = vunpack.c.0.s8 %v1955
    %v1957 = vlaneseq
    %v1958 = vshrl.u32 %v1957, 7
    %v1959 = vsub.s32 %v1956, %v1958
    %v1960 = vrot.slane %v1952, %v1959
    %v1962 = vunpack.c.l.s4 1934713408
    %v1963 = vunpack.c.0.s8 %v1962
    %v1964 = vlaneseq
    %v1965 = vshrl.u32 %v1964, 7
    %v1966 = vsub.s32 %v1963, %v1965
    %v1967 = vrot.slane %v1953, %v1966
    %v1968 = vcombine.high %v1944, 0.0
    %v1969 = vcombine.high %v1951, 0.0
    %v1970 = vcombine.high %v1960, 0.0
    %v1971 = vcombine.high %v1967, 0.0
    %v1972 = vcombine.high %v511, 0.0
    %v1974 = vunpack.c.l.s4 1983009808
    %v1975 = vunpack.c.0.s8 %v1974
    %v1976 = vlaneseq
    %v1977 = vshrl.u32 %v1976, 7
    %v1978 = vsub.s32 %v1975, %v1977
    %v1979 = vrot.slane %v511, %v1978
    %v1981 = vunpack.c.l.s4 1983009808
    %v1982 = vunpack.c.0.s8 %v1981
    %v1983 = vlaneseq
    %v1984 = vshrl.u32 %v1983, 7
    %v1985 = vsub.s32 %v1982, %v1984
    %v1986 = vrot.slane %v1972, %v1985
    %v1987 = vcombine.high %v575, 0.0
    %v1989 = vunpack.c.l.s4 1983009808
    %v1990 = vunpack.c.0.s8 %v1989
    %v1991 = vlaneseq
    %v1992 = vshrl.u32 %v1991, 7
    %v1993 = vsub.s32 %v1990, %v1992
    %v1994 = vrot.slane %v575, %v1993
    %v1996 = vunpack.c.l.s4 1983009808
    %v1997 = vunpack.c.0.s8 %v1996
    %v1998 = vlaneseq
    %v1999 = vshrl.u32 %v1998, 7
    %v2000 = vsub.s32 %v1997, %v1999
    %v2001 = vrot.slane %v1987, %v2000
    %v2002 = vcombine.low %v1979, %v1994
    %v2003 = vcombine.high %v1979, %v1994
    %v2005 = vunpack.c.l.s4 1934713408
    %v2006 = vunpack.c.0.s8 %v2005
    %v2007 = vlaneseq
    %v2008 = vshrl.u32 %v2007, 7
    %v2009 = vsub.s32 %v2006, %v2008
    %v2010 = vrot.slane %v2002, %v2009
    %v2012 = vunpack.c.l.s4 1934713408
    %v2013 = vunpack.c.0.s8 %v2012
    %v2014 = vlaneseq
    %v2015 = vshrl.u32 %v2014, 7
    %v2016 = vsub.s32 %v2013, %v2015
    %v2017 = vrot.slane %v2003, %v2016
    %v2018 = vcombine.low %v1986, %v2001
    %v2019 = vcombine.high %v1986, %v2001
    %v2021 = vunpack.c.l.s4 1934713408
    %v2022 = vunpack.c.0.s8 %v2021
    %v2023 = vlaneseq
    %v2024 = vshrl.u32 %v2023, 7
    %v2025 = vsub.s32 %v2022, %v2024
    %v2026 = vrot.slane %v2018, %v2025
    %v2028 = vunpack.c.l.s4 1934713408
    %v2029 = vunpack.c.0.s8 %v2028
    %v2030 = vlaneseq
    %v2031 = vshrl.u32 %v2030, 7
    %v2032 = vsub.s32 %v2029, %v2031
    %v2033 = vrot.slane %v2019, %v2032
    %v2034 = vcombine.high %v2010, 0.0
    %v2035 = vcombine.high %v2017, 0.0
    %v2036 = vcombine.high %v2026, 0.0
    %v2037 = vcombine.high %v2033, 0.0
    %v2038 = vcombine.high %v512, 0.0
    %v2040 = vunpack.c.l.s4 1983009808
    %v2041 = vunpack.c.0.s8 %v2040
    %v2042 = vlaneseq
    %v2043 = vshrl.u32 %v2042, 7
    %v2044 = vsub.s32 %v2041, %v2043
    %v2045 = vrot.slane %v512, %v2044
    %v2047 = vunpack.c.l.s4 1983009808
    %v2048 = vunpack.c.0.s8 %v2047
    %v2049 = vlaneseq
    %v2050 = vshrl.u32 %v2049, 7
    %v2051 = vsub.s32 %v2048, %v2050
    %v2052 = vrot.slane %v2038, %v2051
    %v2053 = vcombine.high %v576, 0.0
    %v2055 = vunpack.c.l.s4 1983009808
    %v2056 = vunpack.c.0.s8 %v2055
    %v2057 = vlaneseq
    %v2058 = vshrl.u32 %v2057, 7
    %v2059 = vsub.s32 %v2056, %v2058
    %v2060 = vrot.slane %v576, %v2059
    %v2062 = vunpack.c.l.s4 1983009808
    %v2063 = vunpack.c.0.s8 %v2062
    %v2064 = vlaneseq
    %v2065 = vshrl.u32 %v2064, 7
    %v2066 = vsub.s32 %v2063, %v2065
    %v2067 = vrot.slane %v2053, %v2066
    %v2068 = vcombine.low %v2045, %v2060
    %v2069 = vcombine.high %v2045, %v2060
    %v2071 = vunpack.c.l.s4 1934713408
    %v2072 = vunpack.c.0.s8 %v2071
    %v2073 = vlaneseq
    %v2074 = vshrl.u32 %v2073, 7
    %v2075 = vsub.s32 %v2072, %v2074
    %v2076 = vrot.slane %v2068, %v2075
    %v2078 = vunpack.c.l.s4 1934713408
    %v2079 = vunpack.c.0.s8 %v2078
    %v2080 = vlaneseq
    %v2081 = vshrl.u32 %v2080, 7
    %v2082 = vsub.s32 %v2079, %v2081
    %v2083 = vrot.slane %v2069, %v2082
    %v2084 = vcombine.low %v2052, %v2067
    %v2085 = vcombine.high %v2052, %v2067
    %v2087 = vunpack.c.l.s4 1934713408
    %v2088 = vunpack.c.0.s8 %v2087
    %v2089 = vlaneseq
    %v2090 = vshrl.u32 %v2089, 7
    %v2091 = vsub.s32 %v2088, %v2090
    %v2092 = vrot.slane %v2084, %v2091
    %v2094 = vunpack.c.l.s4 1934713408
    %v2095 = vunpack.c.0.s8 %v2094
    %v2096 = vlaneseq
    %v2097 = vshrl.u32 %v2096, 7
    %v2098 = vsub.s32 %v2095, %v2097
    %v2099 = vrot.slane %v2085, %v2098
    %v2100 = vcombine.high %v2076, 0.0
    %v2101 = vcombine.high %v2083, 0.0
    %v2102 = vcombine.high %v2092, 0.0
    %v2103 = vcombine.high %v2099, 0.0
    %v2104 = vcombine.high %v513, 0.0
    %v2106 = vunpack.c.l.s4 1983009808
    %v2107 = vunpack.c.0.s8 %v2106
    %v2108 = vlaneseq
    %v2109 = vshrl.u32 %v2108, 7
    %v2110 = vsub.s32 %v2107, %v2109
    %v2111 = vrot.slane %v513, %v2110
    %v2113 = vunpack.c.l.s4 1983009808
    %v2114 = vunpack.c.0.s8 %v2113
    %v2115 = vlaneseq
    %v2116 = vshrl.u32 %v2115, 7
    %v2117 = vsub.s32 %v2114, %v2116
    %v2118 = vrot.slane %v2104, %v2117
    %v2119 = vcombine.high %v577, 0.0
    %v2121 = vunpack.c.l.s4 1983009808
    %v2122 = vunpack.c.0.s8 %v2121
    %v2123 = vlaneseq
    %v2124 = vshrl.u32 %v2123, 7
    %v2125 = vsub.s32 %v2122, %v2124
    %v2126 = vrot.slane %v577, %v2125
    %v2128 = vunpack.c.l.s4 1983009808
    %v2129 = vunpack.c.0.s8 %v2128
    %v2130 = vlaneseq
    %v2131 = vshrl.u32 %v2130, 7
    %v2132 = vsub.s32 %v2129, %v2131
    %v2133 = vrot.slane %v2119, %v2132
    %v2134 = vcombine.low %v2111, %v2126
    %v2135 = vcombine.high %v2111, %v2126
    %v2137 = vunpack.c.l.s4 1934713408
    %v2138 = vunpack.c.0.s8 %v2137
    %v2139 = vlaneseq
    %v2140 = vshrl.u32 %v2139, 7
    %v2141 = vsub.s32 %v2138, %v2140
    %v2142 = vrot.slane %v2134, %v2141
    %v2144 = vunpack.c.l.s4 1934713408
    %v2145 = vunpack.c.0.s8 %v2144
    %v2146 = vlaneseq
    %v2147 = vshrl.u32 %v2146, 7
    %v2148 = vsub.s32 %v2145, %v2147
    %v2149 = vrot.slane %v2135, %v2148
    %v2150 = vcombine.low %v2118, %v2133
    %v2151 = vcombine.high %v2118, %v2133
    %v2153 = vunpack.c.l.s4 1934713408
    %v2154 = vunpack.c.0.s8 %v2153
    %v2155 = vlaneseq
    %v2156 = vshrl.u32 %v2155, 7
    %v2157 = vsub.s32 %v2154, %v2156
    %v2158 = vrot.slane %v2150, %v2157
    %v2160 = vunpack.c.l.s4 1934713408
    %v2161 = vunpack.c.0.s8 %v2160
    %v2162 = vlaneseq
    %v2163 = vshrl.u32 %v2162, 7
    %v2164 = vsub.s32 %v2161, %v2163
    %v2165 = vrot.slane %v2151, %v2164
    %v2166 = vcombine.high %v2142, 0.0
    %v2167 = vcombine.high %v2149, 0.0
    %v2168 = vcombine.high %v2158, 0.0
    %v2169 = vcombine.high %v2165, 0.0
    %v2170 = vcombine.high %v514, 0.0
    %v2172 = vunpack.c.l.s4 1983009808
    %v2173 = vunpack.c.0.s8 %v2172
    %v2174 = vlaneseq
    %v2175 = vshrl.u32 %v2174, 7
    %v2176 = vsub.s32 %v2173, %v2175
    %v2177 = vrot.slane %v514, %v2176
    %v2179 = vunpack.c.l.s4 1983009808
    %v2180 = vunpack.c.0.s8 %v2179
    %v2181 = vlaneseq
    %v2182 = vshrl.u32 %v2181, 7
    %v2183 = vsub.s32 %v2180, %v2182
    %v2184 = vrot.slane %v2170, %v2183
    %v2185 = vcombine.high %v578, 0.0
    %v2187 = vunpack.c.l.s4 1983009808
    %v2188 = vunpack.c.0.s8 %v2187
    %v2189 = vlaneseq
    %v2190 = vshrl.u32 %v2189, 7
    %v2191 = vsub.s32 %v2188, %v2190
    %v2192 = vrot.slane %v578, %v2191
    %v2194 = vunpack.c.l.s4 1983009808
    %v2195 = vunpack.c.0.s8 %v2194
    %v2196 = vlaneseq
    %v2197 = vshrl.u32 %v2196, 7
    %v2198 = vsub.s32 %v2195, %v2197
    %v2199 = vrot.slane %v2185, %v2198
    %v2200 = vcombine.low %v2177, %v2192
    %v2201 = vcombine.high %v2177, %v2192
    %v2203 = vunpack.c.l.s4 1934713408
    %v2204 = vunpack.c.0.s8 %v2203
    %v2205 = vlaneseq
    %v2206 = vshrl.u32 %v2205, 7
    %v2207 = vsub.s32 %v2204, %v2206
    %v2208 = vrot.slane %v2200, %v2207
    %v2210 = vunpack.c.l.s4 1934713408
    %v2211 = vunpack.c.0.s8 %v2210
    %v2212 = vlaneseq
    %v2213 = vshrl.u32 %v2212, 7
    %v2214 = vsub.s32 %v2211, %v2213
    %v2215 = vrot.slane %v2201, %v2214
    %v2216 = vcombine.low %v2184, %v2199
    %v2217 = vcombine.high %v2184, %v2199
    %v2219 = vunpack.c.l.s4 1934713408
    %v2220 = vunpack.c.0.s8 %v2219
    %v2221 = vlaneseq
    %v2222 = vshrl.u32 %v2221, 7
    %v2223 = vsub.s32 %v2220, %v2222
    %v2224 = vrot.slane %v2216, %v2223
    %v2226 = vunpack.c.l.s4 1934713408
    %v2227 = vunpack.c.0.s8 %v2226
    %v2228 = vlaneseq
    %v2229 = vshrl.u32 %v2228, 7
    %v2230 = vsub.s32 %v2227, %v2229
    %v2231 = vrot.slane %v2217, %v2230
    %v2232 = vcombine.high %v2208, 0.0
    %v2233 = vcombine.high %v2215, 0.0
    %v2234 = vcombine.high %v2224, 0.0
    %v2235 = vcombine.high %v2231, 0.0
    %v2236 = vcombine.high %v515, 0.0
    %v2238 = vunpack.c.l.s4 1983009808
    %v2239 = vunpack.c.0.s8 %v2238
    %v2240 = vlaneseq
    %v2241 = vshrl.u32 %v2240, 7
    %v2242 = vsub.s32 %v2239, %v2241
    %v2243 = vrot.slane %v515, %v2242
    %v2245 = vunpack.c.l.s4 1983009808
    %v2246 = vunpack.c.0.s8 %v2245
    %v2247 = vlaneseq
    %v2248 = vshrl.u32 %v2247, 7
    %v2249 = vsub.s32 %v2246, %v2248
    %v2250 = vrot.slane %v2236, %v2249
    %v2251 = vcombine.high %v579, 0.0
    %v2253 = vunpack.c.l.s4 1983009808
    %v2254 = vunpack.c.0.s8 %v2253
    %v2255 = vlaneseq
    %v2256 = vshrl.u32 %v2255, 7
    %v2257 = vsub.s32 %v2254, %v2256
    %v2258 = vrot.slane %v579, %v2257
    %v2260 = vunpack.c.l.s4 1983009808
    %v2261 = vunpack.c.0.s8 %v2260
    %v2262 = vlaneseq
    %v2263 = vshrl.u32 %v2262, 7
    %v2264 = vsub.s32 %v2261, %v2263
    %v2265 = vrot.slane %v2251, %v2264
    %v2266 = vcombine.low %v2243, %v2258
    %v2267 = vcombine.high %v2243, %v2258
    %v2269 = vunpack.c.l.s4 1934713408
    %v2270 = vunpack.c.0.s8 %v2269
    %v2271 = vlaneseq
    %v2272 = vshrl.u32 %v2271, 7
    %v2273 = vsub.s32 %v2270, %v2272
    %v2274 = vrot.slane %v2266, %v2273
    %v2276 = vunpack.c.l.s4 1934713408
    %v2277 = vunpack.c.0.s8 %v2276
    %v2278 = vlaneseq
    %v2279 = vshrl.u32 %v2278, 7
    %v2280 = vsub.s32 %v2277, %v2279
    %v2281 = vrot.slane %v2267, %v2280
    %v2282 = vcombine.low %v2250, %v2265
    %v2283 = vcombine.high %v2250, %v2265
    %v2285 = vunpack.c.l.s4 1934713408
    %v2286 = vunpack.c.0.s8 %v2285
    %v2287 = vlaneseq
    %v2288 = vshrl.u32 %v2287, 7
    %v2289 = vsub.s32 %v2286, %v2288
    %v2290 = vrot.slane %v2282, %v2289
    %v2292 = vunpack.c.l.s4 1934713408
    %v2293 = vunpack.c.0.s8 %v2292
    %v2294 = vlaneseq
    %v2295 = vshrl.u32 %v2294, 7
    %v2296 = vsub.s32 %v2293, %v2295
    %v2297 = vrot.slane %v2283, %v2296
    %v2298 = vcombine.high %v2274, 0.0
    %v2299 = vcombine.high %v2281, 0.0
    %v2300 = vcombine.high %v2290, 0.0
    %v2301 = vcombine.high %v2297, 0.0
    %v2302 = vcombine.high %v516, 0.0
    %v2304 = vunpack.c.l.s4 1983009808
    %v2305 = vunpack.c.0.s8 %v2304
    %v2306 = vlaneseq
    %v2307 = vshrl.u32 %v2306, 7
    %v2308 = vsub.s32 %v2305, %v2307
    %v2309 = vrot.slane %v516, %v2308
    %v2311 = vunpack.c.l.s4 1983009808
    %v2312 = vunpack.c.0.s8 %v2311
    %v2313 = vlaneseq
    %v2314 = vshrl.u32 %v2313, 7
    %v2315 = vsub.s32 %v2312, %v2314
    %v2316 = vrot.slane %v2302, %v2315
    %v2317 = vcombine.high %v580, 0.0
    %v2319 = vunpack.c.l.s4 1983009808
    %v2320 = vunpack.c.0.s8 %v2319
    %v2321 = vlaneseq
    %v2322 = vshrl.u32 %v2321, 7
    %v2323 = vsub.s32 %v2320, %v2322
    %v2324 = vrot.slane %v580, %v2323
    %v2326 = vunpack.c.l.s4 1983009808
    %v2327 = vunpack.c.0.s8 %v2326
    %v2328 = vlaneseq
    %v2329 = vshrl.u32 %v2328, 7
    %v2330 = vsub.s32 %v2327, %v2329
    %v2331 = vrot.slane %v2317, %v2330
    %v2332 = vcombine.low %v2309, %v2324
    %v2333 = vcombine.high %v2309, %v2324
    %v2335 = vunpack.c.l.s4 1934713408
    %v2336 = vunpack.c.0.s8 %v2335
    %v2337 = vlaneseq
    %v2338 = vshrl.u32 %v2337, 7
    %v2339 = vsub.s32 %v2336, %v2338
    %v2340 = vrot.slane %v2332, %v2339
    %v2342 = vunpack.c.l.s4 1934713408
    %v2343 = vunpack.c.0.s8 %v2342
    %v2344 = vlaneseq
    %v2345 = vshrl.u32 %v2344, 7
    %v2346 = vsub.s32 %v2343, %v2345
    %v2347 = vrot.slane %v2333, %v2346
    %v2348 = vcombine.low %v2316, %v2331
    %v2349 = vcombine.high %v2316, %v2331
    %v2351 = vunpack.c.l.s4 1934713408
    %v2352 = vunpack.c.0.s8 %v2351
    %v2353 = vlaneseq
    %v2354 = vshrl.u32 %v2353, 7
    %v2355 = vsub.s32 %v2352, %v2354
    %v2356 = vrot.slane %v2348, %v2355
    %v2358 = vunpack.c.l.s4 1934713408
    %v2359 = vunpack.c.0.s8 %v2358
    %v2360 = vlaneseq
    %v2361 = vshrl.u32 %v2360, 7
    %v2362 = vsub.s32 %v2359, %v2361
    %v2363 = vrot.slane %v2349, %v2362
    %v2364 = vcombine.high %v2340, 0.0
    %v2365 = vcombine.high %v2347, 0.0
    %v2366 = vcombine.high %v2356, 0.0
    %v2367 = vcombine.high %v2363, 0.0
    %v2368 = vcombine.high %v517, 0.0
    %v2370 = vunpack.c.l.s4 1983009808
    %v2371 = vunpack.c.0.s8 %v2370
    %v2372 = vlaneseq
    %v2373 = vshrl.u32 %v2372, 7
    %v2374 = vsub.s32 %v2371, %v2373
    %v2375 = vrot.slane %v517, %v2374
    %v2377 = vunpack.c.l.s4 1983009808
    %v2378 = vunpack.c.0.s8 %v2377
    %v2379 = vlaneseq
    %v2380 = vshrl.u32 %v2379, 7
    %v2381 = vsub.s32 %v2378, %v2380
    %v2382 = vrot.slane %v2368, %v2381
    %v2383 = vcombine.high %v581, 0.0
    %v2385 = vunpack.c.l.s4 1983009808
    %v2386 = vunpack.c.0.s8 %v2385
    %v2387 = vlaneseq
    %v2388 = vshrl.u32 %v2387, 7
    %v2389 = vsub.s32 %v2386, %v2388
    %v2390 = vrot.slane %v581, %v2389
    %v2392 = vunpack.c.l.s4 1983009808
    %v2393 = vunpack.c.0.s8 %v2392
    %v2394 = vlaneseq
    %v2395 = vshrl.u32 %v2394, 7
    %v2396 = vsub.s32 %v2393, %v2395
    %v2397 = vrot.slane %v2383, %v2396
    %v2398 = vcombine.low %v2375, %v2390
    %v2399 = vcombine.high %v2375, %v2390
    %v2401 = vunpack.c.l.s4 1934713408
    %v2402 = vunpack.c.0.s8 %v2401
    %v2403 = vlaneseq
    %v2404 = vshrl.u32 %v2403, 7
    %v2405 = vsub.s32 %v2402, %v2404
    %v2406 = vrot.slane %v2398, %v2405
    %v2408 = vunpack.c.l.s4 1934713408
    %v2409 = vunpack.c.0.s8 %v2408
    %v2410 = vlaneseq
    %v2411 = vshrl.u32 %v2410, 7
    %v2412 = vsub.s32 %v2409, %v2411
    %v2413 = vrot.slane %v2399, %v2412
    %v2414 = vcombine.low %v2382, %v2397
    %v2415 = vcombine.high %v2382, %v2397
    %v2417 = vunpack.c.l.s4 1934713408
    %v2418 = vunpack.c.0.s8 %v2417
    %v2419 = vlaneseq
    %v2420 = vshrl.u32 %v2419, 7
    %v2421 = vsub.s32 %v2418, %v2420
    %v2422 = vrot.slane %v2414, %v2421
    %v2424 = vunpack.c.l.s4 1934713408
    %v2425 = vunpack.c.0.s8 %v2424
    %v2426 = vlaneseq
    %v2427 = vshrl.u32 %v2426, 7
    %v2428 = vsub.s32 %v2425, %v2427
    %v2429 = vrot.slane %v2415, %v2428
    %v2430 = vcombine.high %v2406, 0.0
    %v2431 = vcombine.high %v2413, 0.0
    %v2432 = vcombine.high %v2422, 0.0
    %v2433 = vcombine.high %v2429, 0.0
    %v2434 = vcombine.high %v518, 0.0
    %v2436 = vunpack.c.l.s4 1983009808
    %v2437 = vunpack.c.0.s8 %v2436
    %v2438 = vlaneseq
    %v2439 = vshrl.u32 %v2438, 7
    %v2440 = vsub.s32 %v2437, %v2439
    %v2441 = vrot.slane %v518, %v2440
    %v2443 = vunpack.c.l.s4 1983009808
    %v2444 = vunpack.c.0.s8 %v2443
    %v2445 = vlaneseq
    %v2446 = vshrl.u32 %v2445, 7
    %v2447 = vsub.s32 %v2444, %v2446
    %v2448 = vrot.slane %v2434, %v2447
    %v2449 = vcombine.high %v582, 0.0
    %v2451 = vunpack.c.l.s4 1983009808
    %v2452 = vunpack.c.0.s8 %v2451
    %v2453 = vlaneseq
    %v2454 = vshrl.u32 %v2453, 7
    %v2455 = vsub.s32 %v2452, %v2454
    %v2456 = vrot.slane %v582, %v2455
    %v2458 = vunpack.c.l.s4 1983009808
    %v2459 = vunpack.c.0.s8 %v2458
    %v2460 = vlaneseq
    %v2461 = vshrl.u32 %v2460, 7
    %v2462 = vsub.s32 %v2459, %v2461
    %v2463 = vrot.slane %v2449, %v2462
    %v2464 = vcombine.low %v2441, %v2456
    %v2465 = vcombine.high %v2441, %v2456
    %v2467 = vunpack.c.l.s4 1934713408
    %v2468 = vunpack.c.0.s8 %v2467
    %v2469 = vlaneseq
    %v2470 = vshrl.u32 %v2469, 7
    %v2471 = vsub.s32 %v2468, %v2470
    %v2472 = vrot.slane %v2464, %v2471
    %v2474 = vunpack.c.l.s4 1934713408
    %v2475 = vunpack.c.0.s8 %v2474
    %v2476 = vlaneseq
    %v2477 = vshrl.u32 %v2476, 7
    %v2478 = vsub.s32 %v2475, %v2477
    %v2479 = vrot.slane %v2465, %v2478
    %v2480 = vcombine.low %v2448, %v2463
    %v2481 = vcombine.high %v2448, %v2463
    %v2483 = vunpack.c.l.s4 1934713408
    %v2484 = vunpack.c.0.s8 %v2483
    %v2485 = vlaneseq
    %v2486 = vshrl.u32 %v2485, 7
    %v2487 = vsub.s32 %v2484, %v2486
    %v2488 = vrot.slane %v2480, %v2487
    %v2490 = vunpack.c.l.s4 1934713408
    %v2491 = vunpack.c.0.s8 %v2490
    %v2492 = vlaneseq
    %v2493 = vshrl.u32 %v2492, 7
    %v2494 = vsub.s32 %v2491, %v2493
    %v2495 = vrot.slane %v2481, %v2494
    %v2496 = vcombine.high %v2472, 0.0
    %v2497 = vcombine.high %v2479, 0.0
    %v2498 = vcombine.high %v2488, 0.0
    %v2499 = vcombine.high %v2495, 0.0
    %v2500 = vcombine.high %v519, 0.0
    %v2502 = vunpack.c.l.s4 1983009808
    %v2503 = vunpack.c.0.s8 %v2502
    %v2504 = vlaneseq
    %v2505 = vshrl.u32 %v2504, 7
    %v2506 = vsub.s32 %v2503, %v2505
    %v2507 = vrot.slane %v519, %v2506
    %v2509 = vunpack.c.l.s4 1983009808
    %v2510 = vunpack.c.0.s8 %v2509
    %v2511 = vlaneseq
    %v2512 = vshrl.u32 %v2511, 7
    %v2513 = vsub.s32 %v2510, %v2512
    %v2514 = vrot.slane %v2500, %v2513
    %v2515 = vcombine.high %v583, 0.0
    %v2517 = vunpack.c.l.s4 1983009808
    %v2518 = vunpack.c.0.s8 %v2517
    %v2519 = vlaneseq
    %v2520 = vshrl.u32 %v2519, 7
    %v2521 = vsub.s32 %v2518, %v2520
    %v2522 = vrot.slane %v583, %v2521
    %v2524 = vunpack.c.l.s4 1983009808
    %v2525 = vunpack.c.0.s8 %v2524
    %v2526 = vlaneseq
    %v2527 = vshrl.u32 %v2526, 7
    %v2528 = vsub.s32 %v2525, %v2527
    %v2529 = vrot.slane %v2515, %v2528
    %v2530 = vcombine.low %v2507, %v2522
    %v2531 = vcombine.high %v2507, %v2522
    %v2533 = vunpack.c.l.s4 1934713408
    %v2534 = vunpack.c.0.s8 %v2533
    %v2535 = vlaneseq
    %v2536 = vshrl.u32 %v2535, 7
    %v2537 = vsub.s32 %v2534, %v2536
    %v2538 = vrot.slane %v2530, %v2537
    %v2540 = vunpack.c.l.s4 1934713408
    %v2541 = vunpack.c.0.s8 %v2540
    %v2542 = vlaneseq
    %v2543 = vshrl.u32 %v2542, 7
    %v2544 = vsub.s32 %v2541, %v2543
    %v2545 = vrot.slane %v2531, %v2544
    %v2546 = vcombine.low %v2514, %v2529
    %v2547 = vcombine.high %v2514, %v2529
    %v2549 = vunpack.c.l.s4 1934713408
    %v2550 = vunpack.c.0.s8 %v2549
    %v2551 = vlaneseq
    %v2552 = vshrl.u32 %v2551, 7
    %v2553 = vsub.s32 %v2550, %v2552
    %v2554 = vrot.slane %v2546, %v2553
    %v2556 = vunpack.c.l.s4 1934713408
    %v2557 = vunpack.c.0.s8 %v2556
    %v2558 = vlaneseq
    %v2559 = vshrl.u32 %v2558, 7
    %v2560 = vsub.s32 %v2557, %v2559
    %v2561 = vrot.slane %v2547, %v2560
    %v2562 = vcombine.high %v2538, 0.0
    %v2563 = vcombine.high %v2545, 0.0
    %v2564 = vcombine.high %v2554, 0.0
    %v2565 = vcombine.high %v2561, 0.0
    %v2566 = vcombine.high %v520, 0.0
    %v2568 = vunpack.c.l.s4 1983009808
    %v2569 = vunpack.c.0.s8 %v2568
    %v2570 = vlaneseq
    %v2571 = vshrl.u32 %v2570, 7
    %v2572 = vsub.s32 %v2569, %v2571
    %v2573 = vrot.slane %v520, %v2572
    %v2575 = vunpack.c.l.s4 1983009808
    %v2576 = vunpack.c.0.s8 %v2575
    %v2577 = vlaneseq
    %v2578 = vshrl.u32 %v2577, 7
    %v2579 = vsub.s32 %v2576, %v2578
    %v2580 = vrot.slane %v2566, %v2579
    %v2581 = vcombine.high %v584, 0.0
    %v2583 = vunpack.c.l.s4 1983009808
    %v2584 = vunpack.c.0.s8 %v2583
    %v2585 = vlaneseq
    %v2586 = vshrl.u32 %v2585, 7
    %v2587 = vsub.s32 %v2584, %v2586
    %v2588 = vrot.slane %v584, %v2587
    %v2590 = vunpack.c.l.s4 1983009808
    %v2591 = vunpack.c.0.s8 %v2590
    %v2592 = vlaneseq
    %v2593 = vshrl.u32 %v2592, 7
    %v2594 = vsub.s32 %v2591, %v2593
    %v2595 = vrot.slane %v2581, %v2594
    %v2596 = vcombine.low %v2573, %v2588
    %v2597 = vcombine.high %v2573, %v2588
    %v2599 = vunpack.c.l.s4 1934713408
    %v2600 = vunpack.c.0.s8 %v2599
    %v2601 = vlaneseq
    %v2602 = vshrl.u32 %v2601, 7
    %v2603 = vsub.s32 %v2600, %v2602
    %v2604 = vrot.slane %v2596, %v2603
    %v2606 = vunpack.c.l.s4 1934713408
    %v2607 = vunpack.c.0.s8 %v2606
    %v2608 = vlaneseq
    %v2609 = vshrl.u32 %v2608, 7
    %v2610 = vsub.s32 %v2607, %v2609
    %v2611 = vrot.slane %v2597, %v2610
    %v2612 = vcombine.low %v2580, %v2595
    %v2613 = vcombine.high %v2580, %v2595
    %v2615 = vunpack.c.l.s4 1934713408
    %v2616 = vunpack.c.0.s8 %v2615
    %v2617 = vlaneseq
    %v2618 = vshrl.u32 %v2617, 7
    %v2619 = vsub.s32 %v2616, %v2618
    %v2620 = vrot.slane %v2612, %v2619
    %v2622 = vunpack.c.l.s4 1934713408
    %v2623 = vunpack.c.0.s8 %v2622
    %v2624 = vlaneseq
    %v2625 = vshrl.u32 %v2624, 7
    %v2626 = vsub.s32 %v2623, %v2625
    %v2627 = vrot.slane %v2613, %v2626
    %v2628 = vcombine.high %v2604, 0.0
    %v2629 = vcombine.high %v2611, 0.0
    %v2630 = vcombine.high %v2620, 0.0
    %v2631 = vcombine.high %v2627, 0.0
    %v2632 = vcombine.high %v521, 0.0
    %v2634 = vunpack.c.l.s4 1983009808
    %v2635 = vunpack.c.0.s8 %v2634
    %v2636 = vlaneseq
    %v2637 = vshrl.u32 %v2636, 7
    %v2638 = vsub.s32 %v2635, %v2637
    %v2639 = vrot.slane %v521, %v2638
    %v2641 = vunpack.c.l.s4 1983009808
    %v2642 = vunpack.c.0.s8 %v2641
    %v2643 = vlaneseq
    %v2644 = vshrl.u32 %v2643, 7
    %v2645 = vsub.s32 %v2642, %v2644
    %v2646 = vrot.slane %v2632, %v2645
    %v2647 = vcombine.high %v585, 0.0
    %v2649 = vunpack.c.l.s4 1983009808
    %v2650 = vunpack.c.0.s8 %v2649
    %v2651 = vlaneseq
    %v2652 = vshrl.u32 %v2651, 7
    %v2653 = vsub.s32 %v2650, %v2652
    %v2654 = vrot.slane %v585, %v2653
    %v2656 = vunpack.c.l.s4 1983009808
    %v2657 = vunpack.c.0.s8 %v2656
    %v2658 = vlaneseq
    %v2659 = vshrl.u32 %v2658, 7
    %v2660 = vsub.s32 %v2657, %v2659
    %v2661 = vrot.slane %v2647, %v2660
    %v2662 = vcombine.low %v2639, %v2654
    %v2663 = vcombine.high %v2639, %v2654
    %v2665 = vunpack.c.l.s4 1934713408
    %v2666 = vunpack.c.0.s8 %v2665
    %v2667 = vlaneseq
    %v2668 = vshrl.u32 %v2667, 7
    %v2669 = vsub.s32 %v2666, %v2668
    %v2670 = vrot.slane %v2662, %v2669
    %v2672 = vunpack.c.l.s4 1934713408
    %v2673 = vunpack.c.0.s8 %v2672
    %v2674 = vlaneseq
    %v2675 = vshrl.u32 %v2674, 7
    %v2676 = vsub.s32 %v2673, %v2675
    %v2677 = vrot.slane %v2663, %v2676
    %v2678 = vcombine.low %v2646, %v2661
    %v2679 = vcombine.high %v2646, %v2661
    %v2681 = vunpack.c.l.s4 1934713408
    %v2682 = vunpack.c.0.s8 %v2681
    %v2683 = vlaneseq
    %v2684 = vshrl.u32 %v2683, 7
    %v2685 = vsub.s32 %v2682, %v2684
    %v2686 = vrot.slane %v2678, %v2685
    %v2688 = vunpack.c.l.s4 1934713408
    %v2689 = vunpack.c.0.s8 %v2688
    %v2690 = vlaneseq
    %v2691 = vshrl.u32 %v2690, 7
    %v2692 = vsub.s32 %v2689, %v2691
    %v2693 = vrot.slane %v2679, %v2692
    %v2694 = vcombine.high %v2670, 0.0
    %v2695 = vcombine.high %v2677, 0.0
    %v2696 = vcombine.high %v2686, 0.0
    %v2697 = vcombine.high %v2693, 0.0
    %2699 = vrot.lane.b32.xlu0 %v648, 4
    %v2700 = vpop.permute.xlu0 %2699
    %2703 = vrot.lane.b32.xlu0 %v631, 8
    %v2704 = vpop.permute.xlu0 %2703
    %2707 = vrot.lane.b32.xlu0 %v649, 12
    %v2708 = vpop.permute.xlu0 %2707
    %2711 = vrot.lane.b32.xlu0 %v640, 16
    %v2712 = vpop.permute.xlu0 %2711
    %2715 = vrot.lane.b32.xlu0 %v650, 20
    %v2716 = vpop.permute.xlu0 %2715
    %2719 = vrot.lane.b32.xlu0 %v647, 24
    %v2720 = vpop.permute.xlu0 %2719
    %2723 = vrot.lane.b32.xlu0 %v651, 28
    %v2724 = vpop.permute.xlu0 %2723
    %2727 = vrot.lane.b32.xlu0 %v690, 32
    %v2728 = vpop.permute.xlu0 %2727
    %2731 = vrot.lane.b32.xlu0 %v714, 36
    %v2732 = vpop.permute.xlu0 %2731
    %2735 = vrot.lane.b32.xlu0 %v697, 40
    %v2736 = vpop.permute.xlu0 %2735
    %2739 = vrot.lane.b32.xlu0 %v715, 44
    %v2740 = vpop.permute.xlu0 %2739
    %2743 = vrot.lane.b32.xlu0 %v706, 48
    %v2744 = vpop.permute.xlu0 %2743
    %2747 = vrot.lane.b32.xlu0 %v716, 52
    %v2748 = vpop.permute.xlu0 %2747
    %2751 = vrot.lane.b32.xlu0 %v713, 56
    %v2752 = vpop.permute.xlu0 %2751
    %2755 = vrot.lane.b32.xlu0 %v717, 60
    %v2756 = vpop.permute.xlu0 %2755
    %2759 = vrot.lane.b32.xlu0 %v756, 64
    %v2760 = vpop.permute.xlu0 %2759
    %2763 = vrot.lane.b32.xlu0 %v780, 68
    %v2764 = vpop.permute.xlu0 %2763
    %2767 = vrot.lane.b32.xlu0 %v763, 72
    %v2768 = vpop.permute.xlu0 %2767
    %2771 = vrot.lane.b32.xlu0 %v781, 76
    %v2772 = vpop.permute.xlu0 %2771
    %2775 = vrot.lane.b32.xlu0 %v772, 80
    %v2776 = vpop.permute.xlu0 %2775
    %2779 = vrot.lane.b32.xlu0 %v782, 84
    %v2780 = vpop.permute.xlu0 %2779
    %2783 = vrot.lane.b32.xlu0 %v779, 88
    %v2784 = vpop.permute.xlu0 %2783
    %2787 = vrot.lane.b32.xlu0 %v783, 92
    %v2788 = vpop.permute.xlu0 %2787
    %2791 = vrot.lane.b32.xlu0 %v822, 96
    %v2792 = vpop.permute.xlu0 %2791
    %2795 = vrot.lane.b32.xlu0 %v846, 100
    %v2796 = vpop.permute.xlu0 %2795
    %2799 = vrot.lane.b32.xlu0 %v829, 104
    %v2800 = vpop.permute.xlu0 %2799
    %2803 = vrot.lane.b32.xlu0 %v847, 108
    %v2804 = vpop.permute.xlu0 %2803
    %2807 = vrot.lane.b32.xlu0 %v838, 112
    %v2808 = vpop.permute.xlu0 %2807
    %2811 = vrot.lane.b32.xlu0 %v848, 116
    %v2812 = vpop.permute.xlu0 %2811
    %2815 = vrot.lane.b32.xlu0 %v845, 120
    %v2816 = vpop.permute.xlu0 %2815
    %2819 = vrot.lane.b32.xlu0 %v849, 124
    %v2820 = vpop.permute.xlu0 %2819
    %2823 = vrot.lane.b32.xlu0 %v912, 4
    %v2824 = vpop.permute.xlu0 %2823
    %2827 = vrot.lane.b32.xlu0 %v895, 8
    %v2828 = vpop.permute.xlu0 %2827
    %2831 = vrot.lane.b32.xlu0 %v913, 12
    %v2832 = vpop.permute.xlu0 %2831
    %2835 = vrot.lane.b32.xlu0 %v904, 16
    %v2836 = vpop.permute.xlu0 %2835
    %2839 = vrot.lane.b32.xlu0 %v914, 20
    %v2840 = vpop.permute.xlu0 %2839
    %2843 = vrot.lane.b32.xlu0 %v911, 24
    %v2844 = vpop.permute.xlu0 %2843
    %2847 = vrot.lane.b32.xlu0 %v915, 28
    %v2848 = vpop.permute.xlu0 %2847
    %2851 = vrot.lane.b32.xlu0 %v954, 32
    %v2852 = vpop.permute.xlu0 %2851
    %2855 = vrot.lane.b32.xlu0 %v978, 36
    %v2856 = vpop.permute.xlu0 %2855
    %2859 = vrot.lane.b32.xlu0 %v961, 40
    %v2860 = vpop.permute.xlu0 %2859
    %2863 = vrot.lane.b32.xlu0 %v979, 44
    %v2864 = vpop.permute.xlu0 %2863
    %2867 = vrot.lane.b32.xlu0 %v970, 48
    %v2868 = vpop.permute.xlu0 %2867
    %2871 = vrot.lane.b32.xlu0 %v980, 52
    %v2872 = vpop.permute.xlu0 %2871
    %2875 = vrot.lane.b32.xlu0 %v977, 56
    %v2876 = vpop.permute.xlu0 %2875
    %2879 = vrot.lane.b32.xlu0 %v981, 60
    %v2880 = vpop.permute.xlu0 %2879
    %2883 = vrot.lane.b32.xlu0 %v1020, 64
    %v2884 = vpop.permute.xlu0 %2883
    %2887 = vrot.lane.b32.xlu0 %v1044, 68
    %v2888 = vpop.permute.xlu0 %2887
    %2891 = vrot.lane.b32.xlu0 %v1027, 72
    %v2892 = vpop.permute.xlu0 %2891
    %2895 = vrot.lane.b32.xlu0 %v1045, 76
    %v2896 = vpop.permute.xlu0 %2895
    %2899 = vrot.lane.b32.xlu0 %v1036, 80
    %v2900 = vpop.permute.xlu0 %2899
    %2903 = vrot.lane.b32.xlu0 %v1046, 84
    %v2904 = vpop.permute.xlu0 %2903
    %2907 = vrot.lane.b32.xlu0 %v1043, 88
    %v2908 = vpop.permute.xlu0 %2907
    %2911 = vrot.lane.b32.xlu0 %v1047, 92
    %v2912 = vpop.permute.xlu0 %2911
    %2915 = vrot.lane.b32.xlu0 %v1086, 96
    %v2916 = vpop.permute.xlu0 %2915
    %2919 = vrot.lane.b32.xlu0 %v1110, 100
    %v2920 = vpop.permute.xlu0 %2919
    %2923 = vrot.lane.b32.xlu0 %v1093, 104
    %v2924 = vpop.permute.xlu0 %2923
    %2927 = vrot.lane.b32.xlu0 %v1111, 108
    %v2928 = vpop.permute.xlu0 %2927
    %2931 = vrot.lane.b32.xlu0 %v1102, 112
    %v2932 = vpop.permute.xlu0 %2931
    %2935 = vrot.lane.b32.xlu0 %v1112, 116
    %v2936 = vpop.permute.xlu0 %2935
    %2939 = vrot.lane.b32.xlu0 %v1109, 120
    %v2940 = vpop.permute.xlu0 %2939
    %2943 = vrot.lane.b32.xlu0 %v1113, 124
    %v2944 = vpop.permute.xlu0 %2943
    %2947 = vrot.lane.b32.xlu0 %v1176, 4
    %v2948 = vpop.permute.xlu0 %2947
    %2951 = vrot.lane.b32.xlu0 %v1159, 8
    %v2952 = vpop.permute.xlu0 %2951
    %2955 = vrot.lane.b32.xlu0 %v1177, 12
    %v2956 = vpop.permute.xlu0 %2955
    %2959 = vrot.lane.b32.xlu0 %v1168, 16
    %v2960 = vpop.permute.xlu0 %2959
    %2963 = vrot.lane.b32.xlu0 %v1178, 20
    %v2964 = vpop.permute.xlu0 %2963
    %2967 = vrot.lane.b32.xlu0 %v1175, 24
    %v2968 = vpop.permute.xlu0 %2967
    %2971 = vrot.lane.b32.xlu0 %v1179, 28
    %v2972 = vpop.permute.xlu0 %2971
    %2975 = vrot.lane.b32.xlu0 %v1218, 32
    %v2976 = vpop.permute.xlu0 %2975
    %2979 = vrot.lane.b32.xlu0 %v1242, 36
    %v2980 = vpop.permute.xlu0 %2979
    %2983 = vrot.lane.b32.xlu0 %v1225, 40
    %v2984 = vpop.permute.xlu0 %2983
    %2987 = vrot.lane.b32.xlu0 %v1243, 44
    %v2988 = vpop.permute.xlu0 %2987
    %2991 = vrot.lane.b32.xlu0 %v1234, 48
    %v2992 = vpop.permute.xlu0 %2991
    %2995 = vrot.lane.b32.xlu0 %v1244, 52
    %v2996 = vpop.permute.xlu0 %2995
    %2999 = vrot.lane.b32.xlu0 %v1241, 56
    %v3000 = vpop.permute.xlu0 %2999
    %3003 = vrot.lane.b32.xlu0 %v1245, 60
    %v3004 = vpop.permute.xlu0 %3003
    %3007 = vrot.lane.b32.xlu0 %v1284, 64
    %v3008 = vpop.permute.xlu0 %3007
    %3011 = vrot.lane.b32.xlu0 %v1308, 68
    %v3012 = vpop.permute.xlu0 %3011
    %3015 = vrot.lane.b32.xlu0 %v1291, 72
    %v3016 = vpop.permute.xlu0 %3015
    %3019 = vrot.lane.b32.xlu0 %v1309, 76
    %v3020 = vpop.permute.xlu0 %3019
    %3023 = vrot.lane.b32.xlu0 %v1300, 80
    %v3024 = vpop.permute.xlu0 %3023
    %3027 = vrot.lane.b32.xlu0 %v1310, 84
    %v3028 = vpop.permute.xlu0 %3027
    %3031 = vrot.lane.b32.xlu0 %v1307, 88
    %v3032 = vpop.permute.xlu0 %3031
    %3035 = vrot.lane.b32.xlu0 %v1311, 92
    %v3036 = vpop.permute.xlu0 %3035
    %3039 = vrot.lane.b32.xlu0 %v1350, 96
    %v3040 = vpop.permute.xlu0 %3039
    %3043 = vrot.lane.b32.xlu0 %v1374, 100
    %v3044 = vpop.permute.xlu0 %3043
    %3047 = vrot.lane.b32.xlu0 %v1357, 104
    %v3048 = vpop.permute.xlu0 %3047
    %3051 = vrot.lane.b32.xlu0 %v1375, 108
    %v3052 = vpop.permute.xlu0 %3051
    %3055 = vrot.lane.b32.xlu0 %v1366, 112
    %v3056 = vpop.permute.xlu0 %3055
    %3059 = vrot.lane.b32.xlu0 %v1376, 116
    %v3060 = vpop.permute.xlu0 %3059
    %3063 = vrot.lane.b32.xlu0 %v1373, 120
    %v3064 = vpop.permute.xlu0 %3063
    %3067 = vrot.lane.b32.xlu0 %v1377, 124
    %v3068 = vpop.permute.xlu0 %3067
    %3071 = vrot.lane.b32.xlu0 %v1440, 4
    %v3072 = vpop.permute.xlu0 %3071
    %3075 = vrot.lane.b32.xlu0 %v1423, 8
    %v3076 = vpop.permute.xlu0 %3075
    %3079 = vrot.lane.b32.xlu0 %v1441, 12
    %v3080 = vpop.permute.xlu0 %3079
    %3083 = vrot.lane.b32.xlu0 %v1432, 16
    %v3084 = vpop.permute.xlu0 %3083
    %3087 = vrot.lane.b32.xlu0 %v1442, 20
    %v3088 = vpop.permute.xlu0 %3087
    %3091 = vrot.lane.b32.xlu0 %v1439, 24
    %v3092 = vpop.permute.xlu0 %3091
    %3095 = vrot.lane.b32.xlu0 %v1443, 28
    %v3096 = vpop.permute.xlu0 %3095
    %3099 = vrot.lane.b32.xlu0 %v1482, 32
    %v3100 = vpop.permute.xlu0 %3099
    %3103 = vrot.lane.b32.xlu0 %v1506, 36
    %v3104 = vpop.permute.xlu0 %3103
    %3107 = vrot.lane.b32.xlu0 %v1489, 40
    %v3108 = vpop.permute.xlu0 %3107
    %3111 = vrot.lane.b32.xlu0 %v1507, 44
    %v3112 = vpop.permute.xlu0 %3111
    %3115 = vrot.lane.b32.xlu0 %v1498, 48
    %v3116 = vpop.permute.xlu0 %3115
    %3119 = vrot.lane.b32.xlu0 %v1508, 52
    %v3120 = vpop.permute.xlu0 %3119
    %3123 = vrot.lane.b32.xlu0 %v1505, 56
    %v3124 = vpop.permute.xlu0 %3123
    %3127 = vrot.lane.b32.xlu0 %v1509, 60
    %v3128 = vpop.permute.xlu0 %3127
    %3131 = vrot.lane.b32.xlu0 %v1548, 64
    %v3132 = vpop.permute.xlu0 %3131
    %3135 = vrot.lane.b32.xlu0 %v1572, 68
    %v3136 = vpop.permute.xlu0 %3135
    %3139 = vrot.lane.b32.xlu0 %v1555, 72
    %v3140 = vpop.permute.xlu0 %3139
    %3143 = vrot.lane.b32.xlu0 %v1573, 76
    %v3144 = vpop.permute.xlu0 %3143
    %3147 = vrot.lane.b32.xlu0 %v1564, 80
    %v3148 = vpop.permute.xlu0 %3147
    %3151 = vrot.lane.b32.xlu0 %v1574, 84
    %v3152 = vpop.permute.xlu0 %3151
    %3155 = vrot.lane.b32.xlu0 %v1571, 88
    %v3156 = vpop.permute.xlu0 %3155
    %3159 = vrot.lane.b32.xlu0 %v1575, 92
    %v3160 = vpop.permute.xlu0 %3159
    %3163 = vrot.lane.b32.xlu0 %v1614, 96
    %v3164 = vpop.permute.xlu0 %3163
    %3167 = vrot.lane.b32.xlu0 %v1638, 100
    %v3168 = vpop.permute.xlu0 %3167
    %3171 = vrot.lane.b32.xlu0 %v1621, 104
    %v3172 = vpop.permute.xlu0 %3171
    %3175 = vrot.lane.b32.xlu0 %v1639, 108
    %v3176 = vpop.permute.xlu0 %3175
    %3179 = vrot.lane.b32.xlu0 %v1630, 112
    %v3180 = vpop.permute.xlu0 %3179
    %3183 = vrot.lane.b32.xlu0 %v1640, 116
    %v3184 = vpop.permute.xlu0 %3183
    %3187 = vrot.lane.b32.xlu0 %v1637, 120
    %v3188 = vpop.permute.xlu0 %3187
    %3191 = vrot.lane.b32.xlu0 %v1641, 124
    %v3192 = vpop.permute.xlu0 %3191
    %3195 = vrot.lane.b32.xlu0 %v1704, 4
    %v3196 = vpop.permute.xlu0 %3195
    %3199 = vrot.lane.b32.xlu0 %v1687, 8
    %v3200 = vpop.permute.xlu0 %3199
    %3203 = vrot.lane.b32.xlu0 %v1705, 12
    %v3204 = vpop.permute.xlu0 %3203
    %3207 = vrot.lane.b32.xlu0 %v1696, 16
    %v3208 = vpop.permute.xlu0 %3207
    %3211 = vrot.lane.b32.xlu0 %v1706, 20
    %v3212 = vpop.permute.xlu0 %3211
    %3215 = vrot.lane.b32.xlu0 %v1703, 24
    %v3216 = vpop.permute.xlu0 %3215
    %3219 = vrot.lane.b32.xlu0 %v1707, 28
    %v3220 = vpop.permute.xlu0 %3219
    %3223 = vrot.lane.b32.xlu0 %v1746, 32
    %v3224 = vpop.permute.xlu0 %3223
    %3227 = vrot.lane.b32.xlu0 %v1770, 36
    %v3228 = vpop.permute.xlu0 %3227
    %3231 = vrot.lane.b32.xlu0 %v1753, 40
    %v3232 = vpop.permute.xlu0 %3231
    %3235 = vrot.lane.b32.xlu0 %v1771, 44
    %v3236 = vpop.permute.xlu0 %3235
    %3239 = vrot.lane.b32.xlu0 %v1762, 48
    %v3240 = vpop.permute.xlu0 %3239
    %3243 = vrot.lane.b32.xlu0 %v1772, 52
    %v3244 = vpop.permute.xlu0 %3243
    %3247 = vrot.lane.b32.xlu0 %v1769, 56
    %v3248 = vpop.permute.xlu0 %3247
    %3251 = vrot.lane.b32.xlu0 %v1773, 60
    %v3252 = vpop.permute.xlu0 %3251
    %3255 = vrot.lane.b32.xlu0 %v1812, 64
    %v3256 = vpop.permute.xlu0 %3255
    %3259 = vrot.lane.b32.xlu0 %v1836, 68
    %v3260 = vpop.permute.xlu0 %3259
    %3263 = vrot.lane.b32.xlu0 %v1819, 72
    %v3264 = vpop.permute.xlu0 %3263
    %3267 = vrot.lane.b32.xlu0 %v1837, 76
    %v3268 = vpop.permute.xlu0 %3267
    %3271 = vrot.lane.b32.xlu0 %v1828, 80
    %v3272 = vpop.permute.xlu0 %3271
    %3275 = vrot.lane.b32.xlu0 %v1838, 84
    %v3276 = vpop.permute.xlu0 %3275
    %3279 = vrot.lane.b32.xlu0 %v1835, 88
    %v3280 = vpop.permute.xlu0 %3279
    %3283 = vrot.lane.b32.xlu0 %v1839, 92
    %v3284 = vpop.permute.xlu0 %3283
    %3287 = vrot.lane.b32.xlu0 %v1878, 96
    %v3288 = vpop.permute.xlu0 %3287
    %3291 = vrot.lane.b32.xlu0 %v1902, 100
    %v3292 = vpop.permute.xlu0 %3291
    %3295 = vrot.lane.b32.xlu0 %v1885, 104
    %v3296 = vpop.permute.xlu0 %3295
    %3299 = vrot.lane.b32.xlu0 %v1903, 108
    %v3300 = vpop.permute.xlu0 %3299
    %3303 = vrot.lane.b32.xlu0 %v1894, 112
    %v3304 = vpop.permute.xlu0 %3303
    %3307 = vrot.lane.b32.xlu0 %v1904, 116
    %v3308 = vpop.permute.xlu0 %3307
    %3311 = vrot.lane.b32.xlu0 %v1901, 120
    %v3312 = vpop.permute.xlu0 %3311
    %3315 = vrot.lane.b32.xlu0 %v1905, 124
    %v3316 = vpop.permute.xlu0 %3315
    %3319 = vrot.lane.b32.xlu0 %v1968, 4
    %v3320 = vpop.permute.xlu0 %3319
    %3323 = vrot.lane.b32.xlu0 %v1951, 8
    %v3324 = vpop.permute.xlu0 %3323
    %3327 = vrot.lane.b32.xlu0 %v1969, 12
    %v3328 = vpop.permute.xlu0 %3327
    %3331 = vrot.lane.b32.xlu0 %v1960, 16
    %v3332 = vpop.permute.xlu0 %3331
    %3335 = vrot.lane.b32.xlu0 %v1970, 20
    %v3336 = vpop.permute.xlu0 %3335
    %3339 = vrot.lane.b32.xlu0 %v1967, 24
    %v3340 = vpop.permute.xlu0 %3339
    %3343 = vrot.lane.b32.xlu0 %v1971, 28
    %v3344 = vpop.permute.xlu0 %3343
    %3347 = vrot.lane.b32.xlu0 %v2010, 32
    %v3348 = vpop.permute.xlu0 %3347
    %3351 = vrot.lane.b32.xlu0 %v2034, 36
    %v3352 = vpop.permute.xlu0 %3351
    %3355 = vrot.lane.b32.xlu0 %v2017, 40
    %v3356 = vpop.permute.xlu0 %3355
    %3359 = vrot.lane.b32.xlu0 %v2035, 44
    %v3360 = vpop.permute.xlu0 %3359
    %3363 = vrot.lane.b32.xlu0 %v2026, 48
    %v3364 = vpop.permute.xlu0 %3363
    %3367 = vrot.lane.b32.xlu0 %v2036, 52
    %v3368 = vpop.permute.xlu0 %3367
    %3371 = vrot.lane.b32.xlu0 %v2033, 56
    %v3372 = vpop.permute.xlu0 %3371
    %3375 = vrot.lane.b32.xlu0 %v2037, 60
    %v3376 = vpop.permute.xlu0 %3375
    %3379 = vrot.lane.b32.xlu0 %v2076, 64
    %v3380 = vpop.permute.xlu0 %3379
    %3383 = vrot.lane.b32.xlu0 %v2100, 68
    %v3384 = vpop.permute.xlu0 %3383
    %3387 = vrot.lane.b32.xlu0 %v2083, 72
    %v3388 = vpop.permute.xlu0 %3387
    %3391 = vrot.lane.b32.xlu0 %v2101, 76
    %v3392 = vpop.permute.xlu0 %3391
    %3395 = vrot.lane.b32.xlu0 %v2092, 80
    %v3396 = vpop.permute.xlu0 %3395
    %3399 = vrot.lane.b32.xlu0 %v2102, 84
    %v3400 = vpop.permute.xlu0 %3399
    %3403 = vrot.lane.b32.xlu0 %v2099, 88
    %v3404 = vpop.permute.xlu0 %3403
    %3407 = vrot.lane.b32.xlu0 %v2103, 92
    %v3408 = vpop.permute.xlu0 %3407
    %3411 = vrot.lane.b32.xlu0 %v2142, 96
    %v3412 = vpop.permute.xlu0 %3411
    %3415 = vrot.lane.b32.xlu0 %v2166, 100
    %v3416 = vpop.permute.xlu0 %3415
    %3419 = vrot.lane.b32.xlu0 %v2149, 104
    %v3420 = vpop.permute.xlu0 %3419
    %3423 = vrot.lane.b32.xlu0 %v2167, 108
    %v3424 = vpop.permute.xlu0 %3423
    %3427 = vrot.lane.b32.xlu0 %v2158, 112
    %v3428 = vpop.permute.xlu0 %3427
    %3431 = vrot.lane.b32.xlu0 %v2168, 116
    %v3432 = vpop.permute.xlu0 %3431
    %3435 = vrot.lane.b32.xlu0 %v2165, 120
    %v3436 = vpop.permute.xlu0 %3435
    %3439 = vrot.lane.b32.xlu0 %v2169, 124
    %v3440 = vpop.permute.xlu0 %3439
    %3443 = vrot.lane.b32.xlu0 %v2232, 4
    %v3444 = vpop.permute.xlu0 %3443
    %3447 = vrot.lane.b32.xlu0 %v2215, 8
    %v3448 = vpop.permute.xlu0 %3447
    %3451 = vrot.lane.b32.xlu0 %v2233, 12
    %v3452 = vpop.permute.xlu0 %3451
    %3455 = vrot.lane.b32.xlu0 %v2224, 16
    %v3456 = vpop.permute.xlu0 %3455
    %3459 = vrot.lane.b32.xlu0 %v2234, 20
    %v3460 = vpop.permute.xlu0 %3459
    %3463 = vrot.lane.b32.xlu0 %v2231, 24
    %v3464 = vpop.permute.xlu0 %3463
    %3467 = vrot.lane.b32.xlu0 %v2235, 28
    %v3468 = vpop.permute.xlu0 %3467
    %3471 = vrot.lane.b32.xlu0 %v2274, 32
    %v3472 = vpop.permute.xlu0 %3471
    %3475 = vrot.lane.b32.xlu0 %v2298, 36
    %v3476 = vpop.permute.xlu0 %3475
    %3479 = vrot.lane.b32.xlu0 %v2281, 40
    %v3480 = vpop.permute.xlu0 %3479
    %3483 = vrot.lane.b32.xlu0 %v2299, 44
    %v3484 = vpop.permute.xlu0 %3483
    %3487 = vrot.lane.b32.xlu0 %v2290, 48
    %v3488 = vpop.permute.xlu0 %3487
    %3491 = vrot.lane.b32.xlu0 %v2300, 52
    %v3492 = vpop.permute.xlu0 %3491
    %3495 = vrot.lane.b32.xlu0 %v2297, 56
    %v3496 = vpop.permute.xlu0 %3495
    %3499 = vrot.lane.b32.xlu0 %v2301, 60
    %v3500 = vpop.permute.xlu0 %3499
    %3503 = vrot.lane.b32.xlu0 %v2340, 64
    %v3504 = vpop.permute.xlu0 %3503
    %3507 = vrot.lane.b32.xlu0 %v2364, 68
    %v3508 = vpop.permute.xlu0 %3507
    %3511 = vrot.lane.b32.xlu0 %v2347, 72
    %v3512 = vpop.permute.xlu0 %3511
    %3515 = vrot.lane.b32.xlu0 %v2365, 76
    %v3516 = vpop.permute.xlu0 %3515
    %3519 = vrot.lane.b32.xlu0 %v2356, 80
    %v3520 = vpop.permute.xlu0 %3519
    %3523 = vrot.lane.b32.xlu0 %v2366, 84
    %v3524 = vpop.permute.xlu0 %3523
    %3527 = vrot.lane.b32.xlu0 %v2363, 88
    %v3528 = vpop.permute.xlu0 %3527
    %3531 = vrot.lane.b32.xlu0 %v2367, 92
    %v3532 = vpop.permute.xlu0 %3531
    %3535 = vrot.lane.b32.xlu0 %v2406, 96
    %v3536 = vpop.permute.xlu0 %3535
    %3539 = vrot.lane.b32.xlu0 %v2430, 100
    %v3540 = vpop.permute.xlu0 %3539
    %3543 = vrot.lane.b32.xlu0 %v2413, 104
    %v3544 = vpop.permute.xlu0 %3543
    %3547 = vrot.lane.b32.xlu0 %v2431, 108
    %v3548 = vpop.permute.xlu0 %3547
    %3551 = vrot.lane.b32.xlu0 %v2422, 112
    %v3552 = vpop.permute.xlu0 %3551
    %3555 = vrot.lane.b32.xlu0 %v2432, 116
    %v3556 = vpop.permute.xlu0 %3555
    %3559 = vrot.lane.b32.xlu0 %v2429, 120
    %v3560 = vpop.permute.xlu0 %3559
    %3563 = vrot.lane.b32.xlu0 %v2433, 124
    %v3564 = vpop.permute.xlu0 %3563
    %3567 = vrot.lane.b32.xlu0 %v2496, 4
    %v3568 = vpop.permute.xlu0 %3567
    %3571 = vrot.lane.b32.xlu0 %v2479, 8
    %v3572 = vpop.permute.xlu0 %3571
    %3575 = vrot.lane.b32.xlu0 %v2497, 12
    %v3576 = vpop.permute.xlu0 %3575
    %3579 = vrot.lane.b32.xlu0 %v2488, 16
    %v3580 = vpop.permute.xlu0 %3579
    %3583 = vrot.lane.b32.xlu0 %v2498, 20
    %v3584 = vpop.permute.xlu0 %3583
    %3587 = vrot.lane.b32.xlu0 %v2495, 24
    %v3588 = vpop.permute.xlu0 %3587
    %3591 = vrot.lane.b32.xlu0 %v2499, 28
    %v3592 = vpop.permute.xlu0 %3591
    %3595 = vrot.lane.b32.xlu0 %v2538, 32
    %v3596 = vpop.permute.xlu0 %3595
    %3599 = vrot.lane.b32.xlu0 %v2562, 36
    %v3600 = vpop.permute.xlu0 %3599
    %3603 = vrot.lane.b32.xlu0 %v2545, 40
    %v3604 = vpop.permute.xlu0 %3603
    %3607 = vrot.lane.b32.xlu0 %v2563, 44
    %v3608 = vpop.permute.xlu0 %3607
    %3611 = vrot.lane.b32.xlu0 %v2554, 48
    %v3612 = vpop.permute.xlu0 %3611
    %3615 = vrot.lane.b32.xlu0 %v2564, 52
    %v3616 = vpop.permute.xlu0 %3615
    %3619 = vrot.lane.b32.xlu0 %v2561, 56
    %v3620 = vpop.permute.xlu0 %3619
    %3623 = vrot.lane.b32.xlu0 %v2565, 60
    %v3624 = vpop.permute.xlu0 %3623
    %3627 = vrot.lane.b32.xlu0 %v2604, 64
    %v3628 = vpop.permute.xlu0 %3627
    %3631 = vrot.lane.b32.xlu0 %v2628, 68
    %v3632 = vpop.permute.xlu0 %3631
    %3635 = vrot.lane.b32.xlu0 %v2611, 72
    %v3636 = vpop.permute.xlu0 %3635
    %3639 = vrot.lane.b32.xlu0 %v2629, 76
    %v3640 = vpop.permute.xlu0 %3639
    %3643 = vrot.lane.b32.xlu0 %v2620, 80
    %v3644 = vpop.permute.xlu0 %3643
    %3647 = vrot.lane.b32.xlu0 %v2630, 84
    %v3648 = vpop.permute.xlu0 %3647
    %3651 = vrot.lane.b32.xlu0 %v2627, 88
    %v3652 = vpop.permute.xlu0 %3651
    %3655 = vrot.lane.b32.xlu0 %v2631, 92
    %v3656 = vpop.permute.xlu0 %3655
    %3659 = vrot.lane.b32.xlu0 %v2670, 96
    %v3660 = vpop.permute.xlu0 %3659
    %3663 = vrot.lane.b32.xlu0 %v2694, 100
    %v3664 = vpop.permute.xlu0 %3663
    %3667 = vrot.lane.b32.xlu0 %v2677, 104
    %v3668 = vpop.permute.xlu0 %3667
    %3671 = vrot.lane.b32.xlu0 %v2695, 108
    %v3672 = vpop.permute.xlu0 %3671
    %3675 = vrot.lane.b32.xlu0 %v2686, 112
    %v3676 = vpop.permute.xlu0 %3675
    %3679 = vrot.lane.b32.xlu0 %v2696, 116
    %v3680 = vpop.permute.xlu0 %3679
    %3683 = vrot.lane.b32.xlu0 %v2693, 120
    %v3684 = vpop.permute.xlu0 %3683
    %3687 = vrot.lane.b32.xlu0 %v2697, 124
    %v3688 = vpop.permute.xlu0 %3687
    %vm3690 = vcmask 31744
    %v3691 = vsel %vm3690, %v624, %v2700
    %vm3692 = vcmask 64512
    %v3693 = vsel %vm3692, %v3691, %v2704
    %vm3694 = vcmask 97280
    %v3695 = vsel %vm3694, %v3693, %v2708
    %v3696 = vsel %vm423, %v3695, %v2712
    %vm3697 = vcmask 162816
    %v3698 = vsel %vm3697, %v3696, %v2716
    %vm3699 = vcmask 195584
    %v3700 = vsel %vm3699, %v3698, %v2720
    %vm3701 = vcmask 228352
    %v3702 = vsel %vm3701, %v3700, %v2724
    %v3703 = vsel %vm426, %v3702, %v2728
    %vm3704 = vcmask 293888
    %v3705 = vsel %vm3704, %v3703, %v2732
    %vm3706 = vcmask 326656
    %v3707 = vsel %vm3706, %v3705, %v2736
    %vm3708 = vcmask 359424
    %v3709 = vsel %vm3708, %v3707, %v2740
    %v3710 = vsel %vm429, %v3709, %v2744
    %vm3711 = vcmask 424960
    %v3712 = vsel %vm3711, %v3710, %v2748
    %vm3713 = vcmask 457728
    %v3714 = vsel %vm3713, %v3712, %v2752
    %vm3715 = vcmask 490496
    %v3716 = vsel %vm3715, %v3714, %v2756
    %v3717 = vsel %vm432, %v3716, %v2760
    %vm3718 = vcmask 556032
    %v3719 = vsel %vm3718, %v3717, %v2764
    %vm3720 = vcmask 588800
    %v3721 = vsel %vm3720, %v3719, %v2768
    %vm3722 = vcmask 621568
    %v3723 = vsel %vm3722, %v3721, %v2772
    %v3724 = vsel %vm435, %v3723, %v2776
    %vm3725 = vcmask 687104
    %v3726 = vsel %vm3725, %v3724, %v2780
    %vm3727 = vcmask 719872
    %v3728 = vsel %vm3727, %v3726, %v2784
    %vm3729 = vcmask 752640
    %v3730 = vsel %vm3729, %v3728, %v2788
    %v3731 = vsel %vm438, %v3730, %v2792
    %vm3732 = vcmask 818176
    %v3733 = vsel %vm3732, %v3731, %v2796
    %vm3734 = vcmask 850944
    %v3735 = vsel %vm3734, %v3733, %v2800
    %vm3736 = vcmask 883712
    %v3737 = vsel %vm3736, %v3735, %v2804
    %v3738 = vsel %vm441, %v3737, %v2808
    %vm3739 = vcmask 949248
    %v3740 = vsel %vm3739, %v3738, %v2812
    %vm3741 = vcmask 982016
    %v3742 = vsel %vm3741, %v3740, %v2816
    %vm3743 = vcmask 1014784
    %v3744 = vsel %vm3743, %v3742, %v2820
    %v3745 = vsel %vm3690, %v888, %v2824
    %v3746 = vsel %vm3692, %v3745, %v2828
    %v3747 = vsel %vm3694, %v3746, %v2832
    %v3748 = vsel %vm423, %v3747, %v2836
    %v3749 = vsel %vm3697, %v3748, %v2840
    %v3750 = vsel %vm3699, %v3749, %v2844
    %v3751 = vsel %vm3701, %v3750, %v2848
    %v3752 = vsel %vm426, %v3751, %v2852
    %v3753 = vsel %vm3704, %v3752, %v2856
    %v3754 = vsel %vm3706, %v3753, %v2860
    %v3755 = vsel %vm3708, %v3754, %v2864
    %v3756 = vsel %vm429, %v3755, %v2868
    %v3757 = vsel %vm3711, %v3756, %v2872
    %v3758 = vsel %vm3713, %v3757, %v2876
    %v3759 = vsel %vm3715, %v3758, %v2880
    %v3760 = vsel %vm432, %v3759, %v2884
    %v3761 = vsel %vm3718, %v3760, %v2888
    %v3762 = vsel %vm3720, %v3761, %v2892
    %v3763 = vsel %vm3722, %v3762, %v2896
    %v3764 = vsel %vm435, %v3763, %v2900
    %v3765 = vsel %vm3725, %v3764, %v2904
    %v3766 = vsel %vm3727, %v3765, %v2908
    %v3767 = vsel %vm3729, %v3766, %v2912
    %v3768 = vsel %vm438, %v3767, %v2916
    %v3769 = vsel %vm3732, %v3768, %v2920
    %v3770 = vsel %vm3734, %v3769, %v2924
    %v3771 = vsel %vm3736, %v3770, %v2928
    %v3772 = vsel %vm441, %v3771, %v2932
    %v3773 = vsel %vm3739, %v3772, %v2936
    %v3774 = vsel %vm3741, %v3773, %v2940
    %v3775 = vsel %vm3743, %v3774, %v2944
    %v3776 = vsel %vm3690, %v1152, %v2948
    %v3777 = vsel %vm3692, %v3776, %v2952
    %v3778 = vsel %vm3694, %v3777, %v2956
    %v3779 = vsel %vm423, %v3778, %v2960
    %v3780 = vsel %vm3697, %v3779, %v2964
    %v3781 = vsel %vm3699, %v3780, %v2968
    %v3782 = vsel %vm3701, %v3781, %v2972
    %v3783 = vsel %vm426, %v3782, %v2976
    %v3784 = vsel %vm3704, %v3783, %v2980
    %v3785 = vsel %vm3706, %v3784, %v2984
    %v3786 = vsel %vm3708, %v3785, %v2988
    %v3787 = vsel %vm429, %v3786, %v2992
    %v3788 = vsel %vm3711, %v3787, %v2996
    %v3789 = vsel %vm3713, %v3788, %v3000
    %v3790 = vsel %vm3715, %v3789, %v3004
    %v3791 = vsel %vm432, %v3790, %v3008
    %v3792 = vsel %vm3718, %v3791, %v3012
    %v3793 = vsel %vm3720, %v3792, %v3016
    %v3794 = vsel %vm3722, %v3793, %v3020
    %v3795 = vsel %vm435, %v3794, %v3024
    %v3796 = vsel %vm3725, %v3795, %v3028
    %v3797 = vsel %vm3727, %v3796, %v3032
    %v3798 = vsel %vm3729, %v3797, %v3036
    %v3799 = vsel %vm438, %v3798, %v3040
    %v3800 = vsel %vm3732, %v3799, %v3044
    %v3801 = vsel %vm3734, %v3800, %v3048
    %v3802 = vsel %vm3736, %v3801, %v3052
    %v3803 = vsel %vm441, %v3802, %v3056
    %v3804 = vsel %vm3739, %v3803, %v3060
    %v3805 = vsel %vm3741, %v3804, %v3064
    %v3806 = vsel %vm3743, %v3805, %v3068
    %v3807 = vsel %vm3690, %v1416, %v3072
    %v3808 = vsel %vm3692, %v3807, %v3076
    %v3809 = vsel %vm3694, %v3808, %v3080
    %v3810 = vsel %vm423, %v3809, %v3084
    %v3811 = vsel %vm3697, %v3810, %v3088
    %v3812 = vsel %vm3699, %v3811, %v3092
    %v3813 = vsel %vm3701, %v3812, %v3096
    %v3814 = vsel %vm426, %v3813, %v3100
    %v3815 = vsel %vm3704, %v3814, %v3104
    %v3816 = vsel %vm3706, %v3815, %v3108
    %v3817 = vsel %vm3708, %v3816, %v3112
    %v3818 = vsel %vm429, %v3817, %v3116
    %v3819 = vsel %vm3711, %v3818, %v3120
    %v3820 = vsel %vm3713, %v3819, %v3124
    %v3821 = vsel %vm3715, %v3820, %v3128
    %v3822 = vsel %vm432, %v3821, %v3132
    %v3823 = vsel %vm3718, %v3822, %v3136
    %v3824 = vsel %vm3720, %v3823, %v3140
    %v3825 = vsel %vm3722, %v3824, %v3144
    %v3826 = vsel %vm435, %v3825, %v3148
    %v3827 = vsel %vm3725, %v3826, %v3152
    %v3828 = vsel %vm3727, %v3827, %v3156
    %v3829 = vsel %vm3729, %v3828, %v3160
    %v3830 = vsel %vm438, %v3829, %v3164
    %v3831 = vsel %vm3732, %v3830, %v3168
    %v3832 = vsel %vm3734, %v3831, %v3172
    %v3833 = vsel %vm3736, %v3832, %v3176
    %v3834 = vsel %vm441, %v3833, %v3180
    %v3835 = vsel %vm3739, %v3834, %v3184
    %v3836 = vsel %vm3741, %v3835, %v3188
    %v3837 = vsel %vm3743, %v3836, %v3192
    %v3838 = vsel %vm3690, %v1680, %v3196
    %v3839 = vsel %vm3692, %v3838, %v3200
    %v3840 = vsel %vm3694, %v3839, %v3204
    %v3841 = vsel %vm423, %v3840, %v3208
    %v3842 = vsel %vm3697, %v3841, %v3212
    %v3843 = vsel %vm3699, %v3842, %v3216
    %v3844 = vsel %vm3701, %v3843, %v3220
    %v3845 = vsel %vm426, %v3844, %v3224
    %v3846 = vsel %vm3704, %v3845, %v3228
    %v3847 = vsel %vm3706, %v3846, %v3232
    %v3848 = vsel %vm3708, %v3847, %v3236
    %v3849 = vsel %vm429, %v3848, %v3240
    %v3850 = vsel %vm3711, %v3849, %v3244
    %v3851 = vsel %vm3713, %v3850, %v3248
    %v3852 = vsel %vm3715, %v3851, %v3252
    %v3853 = vsel %vm432, %v3852, %v3256
    %v3854 = vsel %vm3718, %v3853, %v3260
    %v3855 = vsel %vm3720, %v3854, %v3264
    %v3856 = vsel %vm3722, %v3855, %v3268
    %v3857 = vsel %vm435, %v3856, %v3272
    %v3858 = vsel %vm3725, %v3857, %v3276
    %v3859 = vsel %vm3727, %v3858, %v3280
    %v3860 = vsel %vm3729, %v3859, %v3284
    %v3861 = vsel %vm438, %v3860, %v3288
    %v3862 = vsel %vm3732, %v3861, %v3292
    %v3863 = vsel %vm3734, %v3862, %v3296
    %v3864 = vsel %vm3736, %v3863, %v3300
    %v3865 = vsel %vm441, %v3864, %v3304
    %v3866 = vsel %vm3739, %v3865, %v3308
    %v3867 = vsel %vm3741, %v3866, %v3312
    %v3868 = vsel %vm3743, %v3867, %v3316
    %v3869 = vsel %vm3690, %v1944, %v3320
    %v3870 = vsel %vm3692, %v3869, %v3324
    %v3871 = vsel %vm3694, %v3870, %v3328
    %v3872 = vsel %vm423, %v3871, %v3332
    %v3873 = vsel %vm3697, %v3872, %v3336
    %v3874 = vsel %vm3699, %v3873, %v3340
    %v3875 = vsel %vm3701, %v3874, %v3344
    %v3876 = vsel %vm426, %v3875, %v3348
    %v3877 = vsel %vm3704, %v3876, %v3352
    %v3878 = vsel %vm3706, %v3877, %v3356
    %v3879 = vsel %vm3708, %v3878, %v3360
    %v3880 = vsel %vm429, %v3879, %v3364
    %v3881 = vsel %vm3711, %v3880, %v3368
    %v3882 = vsel %vm3713, %v3881, %v3372
    %v3883 = vsel %vm3715, %v3882, %v3376
    %v3884 = vsel %vm432, %v3883, %v3380
    %v3885 = vsel %vm3718, %v3884, %v3384
    %v3886 = vsel %vm3720, %v3885, %v3388
    %v3887 = vsel %vm3722, %v3886, %v3392
    %v3888 = vsel %vm435, %v3887, %v3396
    %v3889 = vsel %vm3725, %v3888, %v3400
    %v3890 = vsel %vm3727, %v3889, %v3404
    %v3891 = vsel %vm3729, %v3890, %v3408
    %v3892 = vsel %vm438, %v3891, %v3412
    %v3893 = vsel %vm3732, %v3892, %v3416
    %v3894 = vsel %vm3734, %v3893, %v3420
    %v3895 = vsel %vm3736, %v3894, %v3424
    %v3896 = vsel %vm441, %v3895, %v3428
    %v3897 = vsel %vm3739, %v3896, %v3432
    %v3898 = vsel %vm3741, %v3897, %v3436
    %v3899 = vsel %vm3743, %v3898, %v3440
    %v3900 = vsel %vm3690, %v2208, %v3444
    %v3901 = vsel %vm3692, %v3900, %v3448
    %v3902 = vsel %vm3694, %v3901, %v3452
    %v3903 = vsel %vm423, %v3902, %v3456
    %v3904 = vsel %vm3697, %v3903, %v3460
    %v3905 = vsel %vm3699, %v3904, %v3464
    %v3906 = vsel %vm3701, %v3905, %v3468
    %v3907 = vsel %vm426, %v3906, %v3472
    %v3908 = vsel %vm3704, %v3907, %v3476
    %v3909 = vsel %vm3706, %v3908, %v3480
    %v3910 = vsel %vm3708, %v3909, %v3484
    %v3911 = vsel %vm429, %v3910, %v3488
    %v3912 = vsel %vm3711, %v3911, %v3492
    %v3913 = vsel %vm3713, %v3912, %v3496
    %v3914 = vsel %vm3715, %v3913, %v3500
    %v3915 = vsel %vm432, %v3914, %v3504
    %v3916 = vsel %vm3718, %v3915, %v3508
    %v3917 = vsel %vm3720, %v3916, %v3512
    %v3918 = vsel %vm3722, %v3917, %v3516
    %v3919 = vsel %vm435, %v3918, %v3520
    %v3920 = vsel %vm3725, %v3919, %v3524
    %v3921 = vsel %vm3727, %v3920, %v3528
    %v3922 = vsel %vm3729, %v3921, %v3532
    %v3923 = vsel %vm438, %v3922, %v3536
    %v3924 = vsel %vm3732, %v3923, %v3540
    %v3925 = vsel %vm3734, %v3924, %v3544
    %v3926 = vsel %vm3736, %v3925, %v3548
    %v3927 = vsel %vm441, %v3926, %v3552
    %v3928 = vsel %vm3739, %v3927, %v3556
    %v3929 = vsel %vm3741, %v3928, %v3560
    %v3930 = vsel %vm3743, %v3929, %v3564
    %v3931 = vsel %vm3690, %v2472, %v3568
    %v3932 = vsel %vm3692, %v3931, %v3572
    %v3933 = vsel %vm3694, %v3932, %v3576
    %v3934 = vsel %vm423, %v3933, %v3580
    %v3935 = vsel %vm3697, %v3934, %v3584
    %v3936 = vsel %vm3699, %v3935, %v3588
    %v3937 = vsel %vm3701, %v3936, %v3592
    %v3938 = vsel %vm426, %v3937, %v3596
    %v3939 = vsel %vm3704, %v3938, %v3600
    %v3940 = vsel %vm3706, %v3939, %v3604
    %v3941 = vsel %vm3708, %v3940, %v3608
    %v3942 = vsel %vm429, %v3941, %v3612
    %v3943 = vsel %vm3711, %v3942, %v3616
    %v3944 = vsel %vm3713, %v3943, %v3620
    %v3945 = vsel %vm3715, %v3944, %v3624
    %v3946 = vsel %vm432, %v3945, %v3628
    %v3947 = vsel %vm3718, %v3946, %v3632
    %v3948 = vsel %vm3720, %v3947, %v3636
    %v3949 = vsel %vm3722, %v3948, %v3640
    %v3950 = vsel %vm435, %v3949, %v3644
    %v3951 = vsel %vm3725, %v3950, %v3648
    %v3952 = vsel %vm3727, %v3951, %v3652
    %v3953 = vsel %vm3729, %v3952, %v3656
    %v3954 = vsel %vm438, %v3953, %v3660
    %v3955 = vsel %vm3732, %v3954, %v3664
    %v3956 = vsel %vm3734, %v3955, %v3668
    %v3957 = vsel %vm3736, %v3956, %v3672
    %v3958 = vsel %vm441, %v3957, %v3676
    %v3959 = vsel %vm3739, %v3958, %v3680
    %v3960 = vsel %vm3741, %v3959, %v3684
    %v3961 = vsel %vm3743, %v3960, %v3688
    %v3970 = vcombine.low %v3744, %v3775
    %v3971 = vcombine.low %v3806, %v3837
    %v3973 = vunpack.c.l.s4 1983009808
    %v3974 = vunpack.c.0.s8 %v3973
    %v3975 = vlaneseq
    %v3976 = vshrl.u32 %v3975, 7
    %v3977 = vsub.s32 %v3974, %v3976
    %v3978 = vrot.slane %v3970, %v3977
    %v3980 = vunpack.c.l.s4 1983009808
    %v3981 = vunpack.c.0.s8 %v3980
    %v3982 = vlaneseq
    %v3983 = vshrl.u32 %v3982, 7
    %v3984 = vsub.s32 %v3981, %v3983
    %v3985 = vrot.slane %v3971, %v3984
    %v3986 = vcombine.low %v3978, %v3985
    %v3987 = vcombine.low %v3868, %v3899
    %v3988 = vcombine.low %v3930, %v3961
    %v3990 = vunpack.c.l.s4 1983009808
    %v3991 = vunpack.c.0.s8 %v3990
    %v3992 = vlaneseq
    %v3993 = vshrl.u32 %v3992, 7
    %v3994 = vsub.s32 %v3991, %v3993
    %v3995 = vrot.slane %v3987, %v3994
    %v3997 = vunpack.c.l.s4 1983009808
    %v3998 = vunpack.c.0.s8 %v3997
    %v3999 = vlaneseq
    %v4000 = vshrl.u32 %v3999, 7
    %v4001 = vsub.s32 %v3998, %v4000
    %v4002 = vrot.slane %v3988, %v4001
    %v4003 = vcombine.low %v3995, %v4002
    %4006 = vst [vmem:[#allocation5] sm:$0xff] %v3986
    %4007 = vst [vmem:[#allocation5 + $0x8] sm:$0xff] %v4003
    // Predicated region
    $region10: #{tpu_custom_call.1} parent=1 // pred_check
      _
    $region11: #{tpu_custom_call.1} parent=1 // pred_check_branch
      %4009 = sbr.rel (0) target = $region13
    $region12: #{tpu_custom_call.1} parent=1 // pred_region
      %s4011 = ssub.s32 256, 256
      %4012 = vsyncadd [#allocation4], %s4011
      %s4014 = sshll.u32 [#allocation5], 4
      %s4015 = int_to_ptr.vmem [resolvable:$true] %s4014
      %4017 = dma.vmem_to_hbm [thread:$0]  %s4015, 256, %s1, [#allocation4]
    $region13: #{tpu_custom_call.1} parent=1 // pred_fallthru
      _
    // Predicated region
    $region14: #{tpu_custom_call.1} parent=1 // pred_check
      _
    $region15: #{tpu_custom_call.1} parent=1 // pred_check_branch
      %4019 = sbr.rel (0) target = $region17
    $region16: #{tpu_custom_call.1} parent=1 // pred_region
      %4020 = dma.done [#allocation4], 256
    $region17: #{tpu_custom_call.1} parent=1 // pred_fallthru
      _
    %4021 = vsyncpa [#allocation3], 1
    %4022 = vsyncpa [#allocation4], 1

</llo_original>
